<compile_context>
chip_gen: v6e
topology: v6e:2x2x1
jax: 0.10.0
libtpu: 0.0.40
codegen_flags: <defaults>
</compile_context>

<pallas_src>
import jax
import jax.numpy as jnp
from jax.experimental import pallas as pl
from jax.experimental.pallas import tpu as pltpu

INPUT_DIM = 46      # feature size (fixed by the hard-coded 46 in forward)
HIDDEN_DIM = 32
LAYER_DIM = 2
OUTPUT_DIM = 5
SEQ_KEEP = 10       # forward keeps 10 strided timesteps
FC_PAD = 128        # lane-dense padded FC output width

D_IN = SEQ_KEEP * INPUT_DIM     # 460  (flattened per-row input)
D_XP = SEQ_KEEP * HIDDEN_DIM    # 320  (flattened per-row layer-0 projection)


def _round_up(n, m):
    return ((n + m - 1) // m) * m


def _block_diag(*blocks):
    """Small dense block-diagonal builder (wrapper-side XLA glue)."""
    rows = sum(b.shape[0] for b in blocks)
    cols = sum(b.shape[1] for b in blocks)
    out = jnp.zeros((rows, cols), blocks[0].dtype)
    r = c = 0
    for b in blocks:
        out = out.at[r:r + b.shape[0], c:c + b.shape[1]].set(b)
        r += b.shape[0]
        c += b.shape[1]
    return out


def rnn_fc_kernel(x_ref, wbig_ref, b0_ref, wrec_ref, wih1_ref, b1_ref,
                  wfc_ref, bfc_ref, out_ref):
    """2-layer Elman RNN over 10 timesteps + final FC for one batch tile.

    x_ref    : (TB, 460)  bf16   flattened [t0 feats | t1 feats | ... | t9 feats]
    wbig_ref : (460, 320) bf16   block_diag(wih0 x 10)
    b0_ref   : (1, 320)   f32    tile(bih0 + bhh0, 10)
    wrec_ref : (64, 64)   f32    block_diag(whh0, whh1)
    wih1_ref : (32, 32)   f32
    b1_ref   : (1, 32)    f32    bih1 + bhh1
    wfc_ref  : (32, 128)  f32    fc weight padded to 128 output lanes
    bfc_ref  : (1, 128)   f32    fc bias padded
    out_ref  : (TB, 128)  f32
    """
    h = HIDDEN_DIM
    tb = x_ref.shape[0]

    # Hoisted layer-0 input projection for ALL timesteps: one MXU matmul.
    # xp[:, t*H:(t+1)*H] == x_t @ wih0 + (bih0 + bhh0)
    xp = jnp.dot(x_ref[...], wbig_ref[...],
                 preferred_element_type=jnp.float32) + b0_ref[...]     # (TB, 320)

    wrec = wrec_ref[...]       # (2H, 2H)
    wih1 = wih1_ref[...]       # (H, H)
    b1 = b1_ref[...]           # (1, H)

    h_cat = jnp.zeros((tb, 2 * h), jnp.float32)    # [h0 | h1], zero init_hidden
    h1 = jnp.zeros((tb, h), jnp.float32)

    # Short fixed trip count -> static unrolled loop (10 steps).
    # Per step: 2 dependent matmuls (fused recurrent 64-wide + wih1).
    for t in range(SEQ_KEEP):
        rec = jnp.dot(h_cat, wrec, preferred_element_type=jnp.float32)  # (TB, 2H)
        h0 = jnp.tanh(xp[:, t * h:(t + 1) * h] + rec[:, :h])
        h1 = jnp.tanh(jnp.dot(h0, wih1, preferred_element_type=jnp.float32)
                      + b1 + rec[:, h:])
        h_cat = jnp.concatenate([h0, h1], axis=-1)

    # fc(out[:, -1, :]) == fc(last hidden state of top layer); lane-dense store.
    out_ref[...] = (jnp.dot(h1, wfc_ref[...], preferred_element_type=jnp.float32)
                    + bfc_ref[...])


def init_params(key, input_dim=INPUT_DIM, hidden_dim=HIDDEN_DIM,
                output_dim=OUTPUT_DIM):
    """Deterministic synthetic params, PyTorch-style uniform(-1/sqrt(H), 1/sqrt(H))."""
    bound = 1.0 / jnp.sqrt(jnp.float32(hidden_dim))
    ks = jax.random.split(key, 10)
    u = lambda k, shape: jax.random.uniform(k, shape, jnp.float32, -bound, bound)
    return {
        # stored already transposed for the kernel: (in, out)
        "wih0_t": u(ks[0], (input_dim, hidden_dim)),
        "whh0_t": u(ks[1], (hidden_dim, hidden_dim)),
        "bih0":   u(ks[2], (1, hidden_dim)),
        "bhh0":   u(ks[3], (1, hidden_dim)),
        "wih1_t": u(ks[4], (hidden_dim, hidden_dim)),
        "whh1_t": u(ks[5], (hidden_dim, hidden_dim)),
        "bih1":   u(ks[6], (1, hidden_dim)),
        "bhh1":   u(ks[7], (1, hidden_dim)),
        "wfc_t":  u(ks[8], (hidden_dim, output_dim)),
        "bfc":    u(ks[9], (1, output_dim)),
    }


def touchgesture_rnn_forward(x, params, *, block_batch=1024):
    """x: (B, S, 46) with S >= 91.  Returns (B, OUTPUT_DIM) float32."""
    b = x.shape[0]

    # Wrapper glue (pure JAX): x_new[:, i, :] = x[:, 10*i, :] for i in 0..9,
    # flattened to one lane-dense row per batch element, cast to bf16 for DMA/MXU.
    x_new = x[:, 0:10 * SEQ_KEEP:10, :]                               # (B, 10, 46)
    x_flat = x_new.reshape(b, D_IN).astype(jnp.bfloat16)              # (B, 460)

    # Derived / fused parameters (cheap wrapper-side XLA).
    wbig = _block_diag(*([params["wih0_t"]] * SEQ_KEEP)).astype(jnp.bfloat16)  # (460, 320)
    b0 = jnp.tile(params["bih0"] + params["bhh0"], (1, SEQ_KEEP))              # (1, 320)
    wrec = _block_diag(params["whh0_t"], params["whh1_t"])                     # (64, 64)
    b1 = params["bih1"] + params["bhh1"]                                       # (1, 32)
    wfc = jnp.zeros((HIDDEN_DIM, FC_PAD), jnp.float32
                    ).at[:, :OUTPUT_DIM].set(params["wfc_t"])                  # (32, 128)
    bfc = jnp.zeros((1, FC_PAD), jnp.float32
                    ).at[:, :OUTPUT_DIM].set(params["bfc"])                    # (1, 128)

    # Batch tiling: TB rows per grid step (multiple of 8), pad B up if needed.
    tb = min(_round_up(b, 8), _round_up(block_batch, 8))
    b_pad = _round_up(b, tb)
    if b_pad != b:
        x_flat = jnp.pad(x_flat, ((0, b_pad - b), (0, 0)))
    grid = (b_pad // tb,)

    out = pl.pallas_call(
        rnn_fc_kernel,
        out_shape=jax.ShapeDtypeStruct((b_pad, FC_PAD), jnp.float32),
        grid=grid,
        in_specs=[
            pl.BlockSpec((tb, D_IN), lambda i: (i, 0)),            # x tile
            pl.BlockSpec((D_IN, D_XP), lambda i: (0, 0)),          # wbig (resident)
            pl.BlockSpec((1, D_XP), lambda i: (0, 0)),             # b0
            pl.BlockSpec((2 * HIDDEN_DIM, 2 * HIDDEN_DIM), lambda i: (0, 0)),  # wrec
            pl.BlockSpec((HIDDEN_DIM, HIDDEN_DIM), lambda i: (0, 0)),          # wih1
            pl.BlockSpec((1, HIDDEN_DIM), lambda i: (0, 0)),       # b1
            pl.BlockSpec((HIDDEN_DIM, FC_PAD), lambda i: (0, 0)),  # wfc (padded)
            pl.BlockSpec((1, FC_PAD), lambda i: (0, 0)),           # bfc (padded)
        ],
        out_specs=pl.BlockSpec((tb, FC_PAD), lambda i: (i, 0)),
        compiler_params=pltpu.CompilerParams(
            dimension_semantics=("parallel",)),
    )(x_flat, wbig, b0, wrec, params["wih1_t"], b1, wfc, bfc)

    return out[:b, :OUTPUT_DIM]


def reference_forward(x, params):
    """Pure-JAX reference mirroring the PyTorch forward (bf16 input projection,
    f32 recurrence/accumulation — same numerics as the kernel)."""
    x_new = x[:, 0:10 * SEQ_KEEP:10, :].astype(jnp.bfloat16)
    wih0 = params["wih0_t"].astype(jnp.bfloat16)
    b0 = params["bih0"] + params["bhh0"]
    b1 = params["bih1"] + params["bhh1"]
    b = x.shape[0]
    h0 = jnp.zeros((b, HIDDEN_DIM), jnp.float32)
    h1 = jnp.zeros((b, HIDDEN_DIM), jnp.float32)
    for t in range(SEQ_KEEP):
        pre0 = jnp.dot(x_new[:, t, :], wih0,
                       preferred_element_type=jnp.float32) + b0
        h0 = jnp.tanh(pre0 + jnp.dot(h0, params["whh0_t"],
                                     preferred_element_type=jnp.float32))
        h1 = jnp.tanh(jnp.dot(h0, params["wih1_t"],
                              preferred_element_type=jnp.float32) + b1
                      + jnp.dot(h1, params["whh1_t"],
                                preferred_element_type=jnp.float32))
    return jnp.dot(h1, params["wfc_t"],
                   preferred_element_type=jnp.float32) + params["bfc"]


if __name__ == "__main__":
    key = jax.random.PRNGKey(0)
    k_param, k_x1, k_x2 = jax.random.split(key, 3)

    params = init_params(k_param)

    # Case 1: small batch (single grid block, batch padded to 8 internally).
    x_small = jax.random.normal(k_x1, (2, 100, INPUT_DIM), jnp.float32)
    out_small = jax.block_until_ready(touchgesture_rnn_forward(x_small, params))
    ref_small = reference_forward(x_small, params)
    assert out_small.shape == (2, OUTPUT_DIM)
    assert jnp.allclose(out_small, ref_small, atol=2e-4, rtol=2e-4), (
        "mismatch (small)", out_small, ref_small)

    # Case 2: multi-block grid (B=24, TB=8 -> grid=(3,)), minimum seq length 91.
    x_big = jax.random.normal(k_x2, (24, 91, INPUT_DIM), jnp.float32)
    out_big = jax.block_until_ready(
        touchgesture_rnn_forward(x_big, params, block_batch=8))
    ref_big = reference_forward(x_big, params)
    assert out_big.shape == (24, OUTPUT_DIM)
    assert jnp.allclose(out_big, ref_big, atol=2e-4, rtol=2e-4), (
        "mismatch (multi-block)", out_big, ref_big)

    print("KERNEL_OK")
</pallas_src>

<mosaic_0001>
module attributes {stable_mosaic.version = 11 : i64} {
  func.func @rnn_fc_kernel(%arg0: i32, %arg1: memref<8x460xbf16, #tpu.memory_space<vmem>>, %arg2: memref<460x320xbf16, #tpu.memory_space<vmem>>, %arg3: memref<1x320xf32, #tpu.memory_space<vmem>>, %arg4: memref<64x64xf32, #tpu.memory_space<vmem>>, %arg5: memref<32x32xf32, #tpu.memory_space<vmem>>, %arg6: memref<1x32xf32, #tpu.memory_space<vmem>>, %arg7: memref<32x128xf32, #tpu.memory_space<vmem>>, %arg8: memref<1x128xf32, #tpu.memory_space<vmem>>, %arg9: memref<8x128xf32, #tpu.memory_space<vmem>>) attributes {dimension_semantics = [#tpu.dimension_semantics<parallel>], iteration_bounds = array<i64: 1>, scalar_prefetch = 0 : i64, scratch_operands = 0 : i64, tpu.core_type = #tpu.core_type<tc>, window_params = [{transform_indices = @transform_0, window_bounds = array<i64: 8, 460>}, {pipeline_mode = #tpu.pipeline_mode<synchronous>, transform_indices = @transform_1, window_bounds = array<i64: 460, 320>}, {pipeline_mode = #tpu.pipeline_mode<synchronous>, transform_indices = @transform_2, window_bounds = array<i64: 1, 320>}, {pipeline_mode = #tpu.pipeline_mode<synchronous>, transform_indices = @transform_3, window_bounds = array<i64: 64, 64>}, {pipeline_mode = #tpu.pipeline_mode<synchronous>, transform_indices = @transform_4, window_bounds = array<i64: 32, 32>}, {pipeline_mode = #tpu.pipeline_mode<synchronous>, transform_indices = @transform_5, window_bounds = array<i64: 1, 32>}, {pipeline_mode = #tpu.pipeline_mode<synchronous>, transform_indices = @transform_6, window_bounds = array<i64: 32, 128>}, {pipeline_mode = #tpu.pipeline_mode<synchronous>, transform_indices = @transform_7, window_bounds = array<i64: 1, 128>}, {transform_indices = @transform_8, window_bounds = array<i64: 8, 128>}]} {
    %c0 = arith.constant 0 : index
    %c0_0 = arith.constant 0 : index
    %0 = vector.load %arg1[%c0, %c0_0] : memref<8x460xbf16, #tpu.memory_space<vmem>>, vector<8x460xbf16>
    %c0_1 = arith.constant 0 : index
    %c0_2 = arith.constant 0 : index
    %1 = vector.load %arg2[%c0_1, %c0_2] : memref<460x320xbf16, #tpu.memory_space<vmem>>, vector<460x320xbf16>
    %cst = arith.constant dense<0.000000e+00> : vector<8x320xf32>
    %2 = tpu.matmul %0, %1, %cst {dimension_numbers = #tpu.dot_dimension_numbers<[1], [0], [0], [1], [0, 0, 1, 1], [], []>} : vector<8x460xbf16>, vector<460x320xbf16>, vector<8x320xf32> -> vector<8x320xf32>
    %c0_3 = arith.constant 0 : index
    %c0_4 = arith.constant 0 : index
    %3 = vector.load %arg3[%c0_3, %c0_4] : memref<1x320xf32, #tpu.memory_space<vmem>>, vector<1x320xf32>
    %4 = vector.broadcast %3 : vector<1x320xf32> to vector<8x320xf32>
    %5 = arith.addf %2, %4 : vector<8x320xf32>
    %c0_5 = arith.constant 0 : index
    %c0_6 = arith.constant 0 : index
    %6 = vector.load %arg4[%c0_5, %c0_6] : memref<64x64xf32, #tpu.memory_space<vmem>>, vector<64x64xf32>
    %c0_7 = arith.constant 0 : index
    %c0_8 = arith.constant 0 : index
    %7 = vector.load %arg5[%c0_7, %c0_8] : memref<32x32xf32, #tpu.memory_space<vmem>>, vector<32x32xf32>
    %c0_9 = arith.constant 0 : index
    %c0_10 = arith.constant 0 : index
    %8 = vector.load %arg6[%c0_9, %c0_10] : memref<1x32xf32, #tpu.memory_space<vmem>>, vector<1x32xf32>
    %cst_11 = arith.constant 0.000000e+00 : f32
    %9 = vector.broadcast %cst_11 : f32 to vector<8x64xf32>
    %cst_12 = arith.constant dense<0.000000e+00> : vector<8x64xf32>
    %10 = tpu.matmul %9, %6, %cst_12 {dimension_numbers = #tpu.dot_dimension_numbers<[1], [0], [0], [1], [0, 0, 1, 1], [], []>} : vector<8x64xf32>, vector<64x64xf32>, vector<8x64xf32> -> vector<8x64xf32>
    %11 = vector.extract_strided_slice %5 {offsets = [0, 0], sizes = [8, 32], strides = [1, 1]} : vector<8x320xf32> to vector<8x32xf32>
    %12 = vector.extract_strided_slice %10 {offsets = [0, 0], sizes = [8, 32], strides = [1, 1]} : vector<8x64xf32> to vector<8x32xf32>
    %13 = arith.addf %11, %12 : vector<8x32xf32>
    %14 = math.tanh %13 : vector<8x32xf32>
    %cst_13 = arith.constant dense<0.000000e+00> : vector<8x32xf32>
    %15 = tpu.matmul %14, %7, %cst_13 {dimension_numbers = #tpu.dot_dimension_numbers<[1], [0], [0], [1], [0, 0, 1, 1], [], []>} : vector<8x32xf32>, vector<32x32xf32>, vector<8x32xf32> -> vector<8x32xf32>
    %16 = vector.broadcast %8 : vector<1x32xf32> to vector<8x32xf32>
    %17 = arith.addf %15, %16 : vector<8x32xf32>
    %18 = vector.extract_strided_slice %10 {offsets = [0, 32], sizes = [8, 32], strides = [1, 1]} : vector<8x64xf32> to vector<8x32xf32>
    %19 = arith.addf %17, %18 : vector<8x32xf32>
    %20 = math.tanh %19 : vector<8x32xf32>
    %21 = tpu.concatenate %14, %20 in 1 : vector<8x32xf32>, vector<8x32xf32> -> vector<8x64xf32>
    %cst_14 = arith.constant dense<0.000000e+00> : vector<8x64xf32>
    %22 = tpu.matmul %21, %6, %cst_14 {dimension_numbers = #tpu.dot_dimension_numbers<[1], [0], [0], [1], [0, 0, 1, 1], [], []>} : vector<8x64xf32>, vector<64x64xf32>, vector<8x64xf32> -> vector<8x64xf32>
    %23 = vector.extract_strided_slice %5 {offsets = [0, 32], sizes = [8, 32], strides = [1, 1]} : vector<8x320xf32> to vector<8x32xf32>
    %24 = vector.extract_strided_slice %22 {offsets = [0, 0], sizes = [8, 32], strides = [1, 1]} : vector<8x64xf32> to vector<8x32xf32>
    %25 = arith.addf %23, %24 : vector<8x32xf32>
    %26 = math.tanh %25 : vector<8x32xf32>
    %cst_15 = arith.constant dense<0.000000e+00> : vector<8x32xf32>
    %27 = tpu.matmul %26, %7, %cst_15 {dimension_numbers = #tpu.dot_dimension_numbers<[1], [0], [0], [1], [0, 0, 1, 1], [], []>} : vector<8x32xf32>, vector<32x32xf32>, vector<8x32xf32> -> vector<8x32xf32>
    %28 = vector.broadcast %8 : vector<1x32xf32> to vector<8x32xf32>
    %29 = arith.addf %27, %28 : vector<8x32xf32>
    %30 = vector.extract_strided_slice %22 {offsets = [0, 32], sizes = [8, 32], strides = [1, 1]} : vector<8x64xf32> to vector<8x32xf32>
    %31 = arith.addf %29, %30 : vector<8x32xf32>
    %32 = math.tanh %31 : vector<8x32xf32>
    %33 = tpu.concatenate %26, %32 in 1 : vector<8x32xf32>, vector<8x32xf32> -> vector<8x64xf32>
    %cst_16 = arith.constant dense<0.000000e+00> : vector<8x64xf32>
    %34 = tpu.matmul %33, %6, %cst_16 {dimension_numbers = #tpu.dot_dimension_numbers<[1], [0], [0], [1], [0, 0, 1, 1], [], []>} : vector<8x64xf32>, vector<64x64xf32>, vector<8x64xf32> -> vector<8x64xf32>
    %35 = vector.extract_strided_slice %5 {offsets = [0, 64], sizes = [8, 32], strides = [1, 1]} : vector<8x320xf32> to vector<8x32xf32>
    %36 = vector.extract_strided_slice %34 {offsets = [0, 0], sizes = [8, 32], strides = [1, 1]} : vector<8x64xf32> to vector<8x32xf32>
    %37 = arith.addf %35, %36 : vector<8x32xf32>
    %38 = math.tanh %37 : vector<8x32xf32>
    %cst_17 = arith.constant dense<0.000000e+00> : vector<8x32xf32>
    %39 = tpu.matmul %38, %7, %cst_17 {dimension_numbers = #tpu.dot_dimension_numbers<[1], [0], [0], [1], [0, 0, 1, 1], [], []>} : vector<8x32xf32>, vector<32x32xf32>, vector<8x32xf32> -> vector<8x32xf32>
    %40 = vector.broadcast %8 : vector<1x32xf32> to vector<8x32xf32>
    %41 = arith.addf %39, %40 : vector<8x32xf32>
    %42 = vector.extract_strided_slice %34 {offsets = [0, 32], sizes = [8, 32], strides = [1, 1]} : vector<8x64xf32> to vector<8x32xf32>
    %43 = arith.addf %41, %42 : vector<8x32xf32>
    %44 = math.tanh %43 : vector<8x32xf32>
    %45 = tpu.concatenate %38, %44 in 1 : vector<8x32xf32>, vector<8x32xf32> -> vector<8x64xf32>
    %cst_18 = arith.constant dense<0.000000e+00> : vector<8x64xf32>
    %46 = tpu.matmul %45, %6, %cst_18 {dimension_numbers = #tpu.dot_dimension_numbers<[1], [0], [0], [1], [0, 0, 1, 1], [], []>} : vector<8x64xf32>, vector<64x64xf32>, vector<8x64xf32> -> vector<8x64xf32>
    %47 = vector.extract_strided_slice %5 {offsets = [0, 96], sizes = [8, 32], strides = [1, 1]} : vector<8x320xf32> to vector<8x32xf32>
    %48 = vector.extract_strided_slice %46 {offsets = [0, 0], sizes = [8, 32], strides = [1, 1]} : vector<8x64xf32> to vector<8x32xf32>
    %49 = arith.addf %47, %48 : vector<8x32xf32>
    %50 = math.tanh %49 : vector<8x32xf32>
    %cst_19 = arith.constant dense<0.000000e+00> : vector<8x32xf32>
    %51 = tpu.matmul %50, %7, %cst_19 {dimension_numbers = #tpu.dot_dimension_numbers<[1], [0], [0], [1], [0, 0, 1, 1], [], []>} : vector<8x32xf32>, vector<32x32xf32>, vector<8x32xf32> -> vector<8x32xf32>
    %52 = vector.broadcast %8 : vector<1x32xf32> to vector<8x32xf32>
    %53 = arith.addf %51, %52 : vector<8x32xf32>
    %54 = vector.extract_strided_slice %46 {offsets = [0, 32], sizes = [8, 32], strides = [1, 1]} : vector<8x64xf32> to vector<8x32xf32>
    %55 = arith.addf %53, %54 : vector<8x32xf32>
    %56 = math.tanh %55 : vector<8x32xf32>
    %57 = tpu.concatenate %50, %56 in 1 : vector<8x32xf32>, vector<8x32xf32> -> vector<8x64xf32>
    %cst_20 = arith.constant dense<0.000000e+00> : vector<8x64xf32>
    %58 = tpu.matmul %57, %6, %cst_20 {dimension_numbers = #tpu.dot_dimension_numbers<[1], [0], [0], [1], [0, 0, 1, 1], [], []>} : vector<8x64xf32>, vector<64x64xf32>, vector<8x64xf32> -> vector<8x64xf32>
    %59 = vector.extract_strided_slice %5 {offsets = [0, 128], sizes = [8, 32], strides = [1, 1]} : vector<8x320xf32> to vector<8x32xf32>
    %60 = vector.extract_strided_slice %58 {offsets = [0, 0], sizes = [8, 32], strides = [1, 1]} : vector<8x64xf32> to vector<8x32xf32>
    %61 = arith.addf %59, %60 : vector<8x32xf32>
    %62 = math.tanh %61 : vector<8x32xf32>
    %cst_21 = arith.constant dense<0.000000e+00> : vector<8x32xf32>
    %63 = tpu.matmul %62, %7, %cst_21 {dimension_numbers = #tpu.dot_dimension_numbers<[1], [0], [0], [1], [0, 0, 1, 1], [], []>} : vector<8x32xf32>, vector<32x32xf32>, vector<8x32xf32> -> vector<8x32xf32>
    %64 = vector.broadcast %8 : vector<1x32xf32> to vector<8x32xf32>
    %65 = arith.addf %63, %64 : vector<8x32xf32>
    %66 = vector.extract_strided_slice %58 {offsets = [0, 32], sizes = [8, 32], strides = [1, 1]} : vector<8x64xf32> to vector<8x32xf32>
    %67 = arith.addf %65, %66 : vector<8x32xf32>
    %68 = math.tanh %67 : vector<8x32xf32>
    %69 = tpu.concatenate %62, %68 in 1 : vector<8x32xf32>, vector<8x32xf32> -> vector<8x64xf32>
    %cst_22 = arith.constant dense<0.000000e+00> : vector<8x64xf32>
    %70 = tpu.matmul %69, %6, %cst_22 {dimension_numbers = #tpu.dot_dimension_numbers<[1], [0], [0], [1], [0, 0, 1, 1], [], []>} : vector<8x64xf32>, vector<64x64xf32>, vector<8x64xf32> -> vector<8x64xf32>
    %71 = vector.extract_strided_slice %5 {offsets = [0, 160], sizes = [8, 32], strides = [1, 1]} : vector<8x320xf32> to vector<8x32xf32>
    %72 = vector.extract_strided_slice %70 {offsets = [0, 0], sizes = [8, 32], strides = [1, 1]} : vector<8x64xf32> to vector<8x32xf32>
    %73 = arith.addf %71, %72 : vector<8x32xf32>
    %74 = math.tanh %73 : vector<8x32xf32>
    %cst_23 = arith.constant dense<0.000000e+00> : vector<8x32xf32>
    %75 = tpu.matmul %74, %7, %cst_23 {dimension_numbers = #tpu.dot_dimension_numbers<[1], [0], [0], [1], [0, 0, 1, 1], [], []>} : vector<8x32xf32>, vector<32x32xf32>, vector<8x32xf32> -> vector<8x32xf32>
    %76 = vector.broadcast %8 : vector<1x32xf32> to vector<8x32xf32>
    %77 = arith.addf %75, %76 : vector<8x32xf32>
    %78 = vector.extract_strided_slice %70 {offsets = [0, 32], sizes = [8, 32], strides = [1, 1]} : vector<8x64xf32> to vector<8x32xf32>
    %79 = arith.addf %77, %78 : vector<8x32xf32>
    %80 = math.tanh %79 : vector<8x32xf32>
    %81 = tpu.concatenate %74, %80 in 1 : vector<8x32xf32>, vector<8x32xf32> -> vector<8x64xf32>
    %cst_24 = arith.constant dense<0.000000e+00> : vector<8x64xf32>
    %82 = tpu.matmul %81, %6, %cst_24 {dimension_numbers = #tpu.dot_dimension_numbers<[1], [0], [0], [1], [0, 0, 1, 1], [], []>} : vector<8x64xf32>, vector<64x64xf32>, vector<8x64xf32> -> vector<8x64xf32>
    %83 = vector.extract_strided_slice %5 {offsets = [0, 192], sizes = [8, 32], strides = [1, 1]} : vector<8x320xf32> to vector<8x32xf32>
    %84 = vector.extract_strided_slice %82 {offsets = [0, 0], sizes = [8, 32], strides = [1, 1]} : vector<8x64xf32> to vector<8x32xf32>
    %85 = arith.addf %83, %84 : vector<8x32xf32>
    %86 = math.tanh %85 : vector<8x32xf32>
    %cst_25 = arith.constant dense<0.000000e+00> : vector<8x32xf32>
    %87 = tpu.matmul %86, %7, %cst_25 {dimension_numbers = #tpu.dot_dimension_numbers<[1], [0], [0], [1], [0, 0, 1, 1], [], []>} : vector<8x32xf32>, vector<32x32xf32>, vector<8x32xf32> -> vector<8x32xf32>
    %88 = vector.broadcast %8 : vector<1x32xf32> to vector<8x32xf32>
    %89 = arith.addf %87, %88 : vector<8x32xf32>
    %90 = vector.extract_strided_slice %82 {offsets = [0, 32], sizes = [8, 32], strides = [1, 1]} : vector<8x64xf32> to vector<8x32xf32>
    %91 = arith.addf %89, %90 : vector<8x32xf32>
    %92 = math.tanh %91 : vector<8x32xf32>
    %93 = tpu.concatenate %86, %92 in 1 : vector<8x32xf32>, vector<8x32xf32> -> vector<8x64xf32>
    %cst_26 = arith.constant dense<0.000000e+00> : vector<8x64xf32>
    %94 = tpu.matmul %93, %6, %cst_26 {dimension_numbers = #tpu.dot_dimension_numbers<[1], [0], [0], [1], [0, 0, 1, 1], [], []>} : vector<8x64xf32>, vector<64x64xf32>, vector<8x64xf32> -> vector<8x64xf32>
    %95 = vector.extract_strided_slice %5 {offsets = [0, 224], sizes = [8, 32], strides = [1, 1]} : vector<8x320xf32> to vector<8x32xf32>
    %96 = vector.extract_strided_slice %94 {offsets = [0, 0], sizes = [8, 32], strides = [1, 1]} : vector<8x64xf32> to vector<8x32xf32>
    %97 = arith.addf %95, %96 : vector<8x32xf32>
    %98 = math.tanh %97 : vector<8x32xf32>
    %cst_27 = arith.constant dense<0.000000e+00> : vector<8x32xf32>
    %99 = tpu.matmul %98, %7, %cst_27 {dimension_numbers = #tpu.dot_dimension_numbers<[1], [0], [0], [1], [0, 0, 1, 1], [], []>} : vector<8x32xf32>, vector<32x32xf32>, vector<8x32xf32> -> vector<8x32xf32>
    %100 = vector.broadcast %8 : vector<1x32xf32> to vector<8x32xf32>
    %101 = arith.addf %99, %100 : vector<8x32xf32>
    %102 = vector.extract_strided_slice %94 {offsets = [0, 32], sizes = [8, 32], strides = [1, 1]} : vector<8x64xf32> to vector<8x32xf32>
    %103 = arith.addf %101, %102 : vector<8x32xf32>
    %104 = math.tanh %103 : vector<8x32xf32>
    %105 = tpu.concatenate %98, %104 in 1 : vector<8x32xf32>, vector<8x32xf32> -> vector<8x64xf32>
    %cst_28 = arith.constant dense<0.000000e+00> : vector<8x64xf32>
    %106 = tpu.matmul %105, %6, %cst_28 {dimension_numbers = #tpu.dot_dimension_numbers<[1], [0], [0], [1], [0, 0, 1, 1], [], []>} : vector<8x64xf32>, vector<64x64xf32>, vector<8x64xf32> -> vector<8x64xf32>
    %107 = vector.extract_strided_slice %5 {offsets = [0, 256], sizes = [8, 32], strides = [1, 1]} : vector<8x320xf32> to vector<8x32xf32>
    %108 = vector.extract_strided_slice %106 {offsets = [0, 0], sizes = [8, 32], strides = [1, 1]} : vector<8x64xf32> to vector<8x32xf32>
    %109 = arith.addf %107, %108 : vector<8x32xf32>
    %110 = math.tanh %109 : vector<8x32xf32>
    %cst_29 = arith.constant dense<0.000000e+00> : vector<8x32xf32>
    %111 = tpu.matmul %110, %7, %cst_29 {dimension_numbers = #tpu.dot_dimension_numbers<[1], [0], [0], [1], [0, 0, 1, 1], [], []>} : vector<8x32xf32>, vector<32x32xf32>, vector<8x32xf32> -> vector<8x32xf32>
    %112 = vector.broadcast %8 : vector<1x32xf32> to vector<8x32xf32>
    %113 = arith.addf %111, %112 : vector<8x32xf32>
    %114 = vector.extract_strided_slice %106 {offsets = [0, 32], sizes = [8, 32], strides = [1, 1]} : vector<8x64xf32> to vector<8x32xf32>
    %115 = arith.addf %113, %114 : vector<8x32xf32>
    %116 = math.tanh %115 : vector<8x32xf32>
    %117 = tpu.concatenate %110, %116 in 1 : vector<8x32xf32>, vector<8x32xf32> -> vector<8x64xf32>
    %cst_30 = arith.constant dense<0.000000e+00> : vector<8x64xf32>
    %118 = tpu.matmul %117, %6, %cst_30 {dimension_numbers = #tpu.dot_dimension_numbers<[1], [0], [0], [1], [0, 0, 1, 1], [], []>} : vector<8x64xf32>, vector<64x64xf32>, vector<8x64xf32> -> vector<8x64xf32>
    %119 = vector.extract_strided_slice %5 {offsets = [0, 288], sizes = [8, 32], strides = [1, 1]} : vector<8x320xf32> to vector<8x32xf32>
    %120 = vector.extract_strided_slice %118 {offsets = [0, 0], sizes = [8, 32], strides = [1, 1]} : vector<8x64xf32> to vector<8x32xf32>
    %121 = arith.addf %119, %120 : vector<8x32xf32>
    %122 = math.tanh %121 : vector<8x32xf32>
    %cst_31 = arith.constant dense<0.000000e+00> : vector<8x32xf32>
    %123 = tpu.matmul %122, %7, %cst_31 {dimension_numbers = #tpu.dot_dimension_numbers<[1], [0], [0], [1], [0, 0, 1, 1], [], []>} : vector<8x32xf32>, vector<32x32xf32>, vector<8x32xf32> -> vector<8x32xf32>
    %124 = vector.broadcast %8 : vector<1x32xf32> to vector<8x32xf32>
    %125 = arith.addf %123, %124 : vector<8x32xf32>
    %126 = vector.extract_strided_slice %118 {offsets = [0, 32], sizes = [8, 32], strides = [1, 1]} : vector<8x64xf32> to vector<8x32xf32>
    %127 = arith.addf %125, %126 : vector<8x32xf32>
    %128 = math.tanh %127 : vector<8x32xf32>
    %c0_32 = arith.constant 0 : index
    %c0_33 = arith.constant 0 : index
    %129 = vector.load %arg7[%c0_32, %c0_33] : memref<32x128xf32, #tpu.memory_space<vmem>>, vector<32x128xf32>
    %cst_34 = arith.constant dense<0.000000e+00> : vector<8x128xf32>
    %130 = tpu.matmul %128, %129, %cst_34 {dimension_numbers = #tpu.dot_dimension_numbers<[1], [0], [0], [1], [0, 0, 1, 1], [], []>} : vector<8x32xf32>, vector<32x128xf32>, vector<8x128xf32> -> vector<8x128xf32>
    %c0_35 = arith.constant 0 : index
    %c0_36 = arith.constant 0 : index
    %131 = vector.load %arg8[%c0_35, %c0_36] : memref<1x128xf32, #tpu.memory_space<vmem>>, vector<1x128xf32>
    %132 = vector.broadcast %131 : vector<1x128xf32> to vector<8x128xf32>
    %133 = arith.addf %130, %132 : vector<8x128xf32>
    %c0_37 = arith.constant 0 : index
    %c0_38 = arith.constant 0 : index
    %134 = vector.load %arg9[%c0_37, %c0_38] : memref<8x128xf32, #tpu.memory_space<vmem>>, vector<8x128xf32>
    tpu.vector_store %arg9[%c0_37, %c0_38], %133 {strides = array<i32>} : memref<8x128xf32, #tpu.memory_space<vmem>>, vector<8x128xf32>,
    return
  }
  func.func @transform_0(%arg0: i32) -> (i32, i32) {
    %c0_i32 = arith.constant 0 : i32
    %c0_i32_0 = arith.constant 0 : i32
    return %arg0, %c0_i32 : i32, i32
  }
  func.func @transform_1(%arg0: i32) -> (i32, i32) {
    %c0_i32 = arith.constant 0 : i32
    %c0_i32_0 = arith.constant 0 : i32
    %c0_i32_1 = arith.constant 0 : i32
    return %c0_i32, %c0_i32_0 : i32, i32
  }
  func.func @transform_2(%arg0: i32) -> (i32, i32) {
    %c0_i32 = arith.constant 0 : i32
    %c0_i32_0 = arith.constant 0 : i32
    %c0_i32_1 = arith.constant 0 : i32
    return %c0_i32, %c0_i32_0 : i32, i32
  }
  func.func @transform_3(%arg0: i32) -> (i32, i32) {
    %c0_i32 = arith.constant 0 : i32
    %c0_i32_0 = arith.constant 0 : i32
    %c0_i32_1 = arith.constant 0 : i32
    return %c0_i32, %c0_i32_0 : i32, i32
  }
  func.func @transform_4(%arg0: i32) -> (i32, i32) {
    %c0_i32 = arith.constant 0 : i32
    %c0_i32_0 = arith.constant 0 : i32
    %c0_i32_1 = arith.constant 0 : i32
    return %c0_i32, %c0_i32_0 : i32, i32
  }
  func.func @transform_5(%arg0: i32) -> (i32, i32) {
    %c0_i32 = arith.constant 0 : i32
    %c0_i32_0 = arith.constant 0 : i32
    %c0_i32_1 = arith.constant 0 : i32
    return %c0_i32, %c0_i32_0 : i32, i32
  }
  func.func @transform_6(%arg0: i32) -> (i32, i32) {
    %c0_i32 = arith.constant 0 : i32
    %c0_i32_0 = arith.constant 0 : i32
    %c0_i32_1 = arith.constant 0 : i32
    return %c0_i32, %c0_i32_0 : i32, i32
  }
  func.func @transform_7(%arg0: i32) -> (i32, i32) {
    %c0_i32 = arith.constant 0 : i32
    %c0_i32_0 = arith.constant 0 : i32
    %c0_i32_1 = arith.constant 0 : i32
    return %c0_i32, %c0_i32_0 : i32, i32
  }
  func.func @transform_8(%arg0: i32) -> (i32, i32) {
    %c0_i32 = arith.constant 0 : i32
    %c0_i32_0 = arith.constant 0 : i32
    return %arg0, %c0_i32 : i32, i32
  }
}

</mosaic_0001>

<llo_original>
// kernel: tpu_custom_call.1
$region0: #{tpu_custom_call.1}
  #allocation0 [shape = 'u32[]', space=smem, size = 0x4, offset = 0x4, fixed_abs, tag = 'smem constant byte address 0x4 - core index']
  #allocation1 [shape = 'u32[144,128]{1,0:T(1,128)}', space=vmem, size = 0x12000, scoped, tag = 'internal scratch']
  %s0 = inlined_call_operand.vmem [shape: bf16[8,460], index: 0, kind: input, shape index: {}]
  %s1 = inlined_call_operand.vmem [shape: bf16[460,320], index: 1, kind: input, shape index: {}]
  %s2 = inlined_call_operand.vmem [shape: f32[1,320], index: 2, kind: input, shape index: {}]
  %s3 = inlined_call_operand.vmem [shape: f32[64,64], index: 3, kind: input, shape index: {}]
  %s4 = inlined_call_operand.vmem [shape: f32[32,32], index: 4, kind: input, shape index: {}]
  %s5 = inlined_call_operand.vmem [shape: f32[1,32], index: 5, kind: input, shape index: {}]
  %s6 = inlined_call_operand.vmem [shape: f32[32,128], index: 6, kind: input, shape index: {}]
  %s7 = inlined_call_operand.vmem [shape: f32[1,128], index: 7, kind: input, shape index: {}]
  %s8 = inlined_call_operand.hbm [shape: f32[8,128], index: 8, kind: output, shape index: {}]
  %s9 = sld [smem:[#allocation0]]
  $region42: #{tpu_custom_call.1} parent=0
    _
  %s11 = ssub.s32 1, %s9
  %s12 = scalar_select 0, %s11, %s9
  $region1: #{tpu_custom_call.1} parent=0
    #allocation2 [shape = 'u8[4096]{0}', space=vmem, size = 0x1000, scoped, tag = 'output window, operand 0, single buffered']
    #allocation3 [shape = 's32[1]{0}', space=sflag, size = 0x4, scoped, tag = 'scoped memory for tpu_custom_call.1']
    %13 = vsyncpa [#allocation3], 0
    // Predicated region
    $region2: #{tpu_custom_call.1} parent=1 // pred_check
      _
    $region3: #{tpu_custom_call.1} parent=1 // pred_check_branch
      %15 = sbr.rel (0) target = $region5
    $region4: #{tpu_custom_call.1} parent=1 // pred_region
      _
    $region5: #{tpu_custom_call.1} parent=1 // pred_fallthru
      _
    // Predicated region
    $region6: #{tpu_custom_call.1} parent=1 // pred_check
      _
    $region7: #{tpu_custom_call.1} parent=1 // pred_check_branch
      %17 = sbr.rel (0) target = $region9
    $region8: #{tpu_custom_call.1} parent=1 // pred_region
      _
    $region9: #{tpu_custom_call.1} parent=1 // pred_fallthru
      _
    // Predicated region
    $region10: #{tpu_custom_call.1} parent=1 // pred_check
      _
    $region11: #{tpu_custom_call.1} parent=1 // pred_check_branch
      %19 = sbr.rel (0) target = $region13
    $region12: #{tpu_custom_call.1} parent=1 // pred_region
      _
    $region13: #{tpu_custom_call.1} parent=1 // pred_fallthru
      _
    // Predicated region
    $region14: #{tpu_custom_call.1} parent=1 // pred_check
      _
    $region15: #{tpu_custom_call.1} parent=1 // pred_check_branch
      %21 = sbr.rel (0) target = $region17
    $region16: #{tpu_custom_call.1} parent=1 // pred_region
      _
    $region17: #{tpu_custom_call.1} parent=1 // pred_fallthru
      _
    // Predicated region
    $region18: #{tpu_custom_call.1} parent=1 // pred_check
      _
    $region19: #{tpu_custom_call.1} parent=1 // pred_check_branch
      %23 = sbr.rel (0) target = $region21
    $region20: #{tpu_custom_call.1} parent=1 // pred_region
      _
    $region21: #{tpu_custom_call.1} parent=1 // pred_fallthru
      _
    // Predicated region
    $region22: #{tpu_custom_call.1} parent=1 // pred_check
      _
    $region23: #{tpu_custom_call.1} parent=1 // pred_check_branch
      %25 = sbr.rel (0) target = $region25
    $region24: #{tpu_custom_call.1} parent=1 // pred_region
      _
    $region25: #{tpu_custom_call.1} parent=1 // pred_fallthru
      _
    // Predicated region
    $region26: #{tpu_custom_call.1} parent=1 // pred_check
      _
    $region27: #{tpu_custom_call.1} parent=1 // pred_check_branch
      %27 = sbr.rel (0) target = $region29
    $region28: #{tpu_custom_call.1} parent=1 // pred_region
      _
    $region29: #{tpu_custom_call.1} parent=1 // pred_fallthru
      _
    // Predicated region
    $region30: #{tpu_custom_call.1} parent=1 // pred_check
      _
    $region31: #{tpu_custom_call.1} parent=1 // pred_check_branch
      %29 = sbr.rel (0) target = $region33
    $region32: #{tpu_custom_call.1} parent=1 // pred_region
      _
    $region33: #{tpu_custom_call.1} parent=1 // pred_fallthru
      _
    %v31 = vld [vmem:[%s0] sm:$0xff]
    %v32 = vld [vmem:[%s0 + $0x8] sm:$0xff]
    %v33 = vld [vmem:[%s1] sm:$0xff]
    %v34 = vld [vmem:[%s1 + $0x8] sm:$0xf]
    %v35 = vld [vmem:[%s1 + $0xc] sm:$0xff]
    %v36 = vld [vmem:[%s1 + $0x14] sm:$0xf]
    %v37 = vld [vmem:[%s1 + $0x18] sm:$0xff]
    %v38 = vld [vmem:[%s1 + $0x20] sm:$0xf]
    %v39 = vld [vmem:[%s1 + $0x24] sm:$0xff]
    %v40 = vld [vmem:[%s1 + $0x2c] sm:$0xf]
    %v41 = vld [vmem:[%s1 + $0x30] sm:$0xff]
    %v42 = vld [vmem:[%s1 + $0x38] sm:$0xf]
    %v43 = vld [vmem:[%s1 + $0x3c] sm:$0xff]
    %v44 = vld [vmem:[%s1 + $0x44] sm:$0xf]
    %v45 = vld [vmem:[%s1 + $0x48] sm:$0xff]
    %v46 = vld [vmem:[%s1 + $0x50] sm:$0xf]
    %v47 = vld [vmem:[%s1 + $0x54] sm:$0xff]
    %v48 = vld [vmem:[%s1 + $0x5c] sm:$0xf]
    %v49 = vld [vmem:[%s1 + $0x60] sm:$0xff]
    %v50 = vld [vmem:[%s1 + $0x68] sm:$0xf]
    %v51 = vld [vmem:[%s1 + $0x6c] sm:$0xff]
    %v52 = vld [vmem:[%s1 + $0x74] sm:$0xf]
    %v53 = vld [vmem:[%s1 + $0x78] sm:$0xff]
    %v54 = vld [vmem:[%s1 + $0x80] sm:$0xf]
    %v55 = vld [vmem:[%s1 + $0x84] sm:$0xff]
    %v56 = vld [vmem:[%s1 + $0x8c] sm:$0xf]
    %v57 = vld [vmem:[%s1 + $0x90] sm:$0xff]
    %v58 = vld [vmem:[%s1 + $0x98] sm:$0xf]
    %v59 = vld [vmem:[%s1 + $0x9c] sm:$0xff]
    %v60 = vld [vmem:[%s1 + $0xa4] sm:$0xf]
    %v61 = vld [vmem:[%s1 + $0xa8] sm:$0xff]
    %v62 = vld [vmem:[%s1 + $0xb0] sm:$0xf]
    %v63 = vld [vmem:[%s1 + $0xb4] sm:$0xff]
    %v64 = vld [vmem:[%s1 + $0xbc] sm:$0xf]
    %v65 = vld [vmem:[%s1 + $0xc0] sm:$0xff]
    %v66 = vld [vmem:[%s1 + $0xc8] sm:$0xf]
    %v67 = vld [vmem:[%s1 + $0xcc] sm:$0xff]
    %v68 = vld [vmem:[%s1 + $0xd4] sm:$0xf]
    %v69 = vld [vmem:[%s1 + $0xd8] sm:$0xff]
    %v70 = vld [vmem:[%s1 + $0xe0] sm:$0xf]
    %v71 = vld [vmem:[%s1 + $0xe4] sm:$0xff]
    %v72 = vld [vmem:[%s1 + $0xec] sm:$0xf]
    %v73 = vld [vmem:[%s1 + $0xf0] sm:$0xff]
    %v74 = vld [vmem:[%s1 + $0xf8] sm:$0xf]
    %v75 = vld [vmem:[%s1 + $0xfc] sm:$0xff]
    %v76 = vld [vmem:[%s1 + $0x104] sm:$0xf]
    %v77 = vld [vmem:[%s1 + $0x108] sm:$0xff]
    %v78 = vld [vmem:[%s1 + $0x110] sm:$0xf]
    %v79 = vld [vmem:[%s1 + $0x114] sm:$0xff]
    %v80 = vld [vmem:[%s1 + $0x11c] sm:$0xf]
    %v81 = vld [vmem:[%s1 + $0x120] sm:$0xff]
    %v82 = vld [vmem:[%s1 + $0x128] sm:$0xf]
    %v83 = vld [vmem:[%s1 + $0x12c] sm:$0xff]
    %v84 = vld [vmem:[%s1 + $0x134] sm:$0xf]
    %v85 = vld [vmem:[%s1 + $0x138] sm:$0xff]
    %v86 = vld [vmem:[%s1 + $0x140] sm:$0xf]
    %v87 = vld [vmem:[%s1 + $0x144] sm:$0xff]
    %v88 = vld [vmem:[%s1 + $0x14c] sm:$0xf]
    %v89 = vld [vmem:[%s1 + $0x150] sm:$0xff]
    %v90 = vld [vmem:[%s1 + $0x158] sm:$0xf]
    %v91 = vld [vmem:[%s1 + $0x15c] sm:$0xff]
    %v92 = vld [vmem:[%s1 + $0x164] sm:$0xf]
    %v93 = vld [vmem:[%s1 + $0x168] sm:$0xff]
    %v94 = vld [vmem:[%s1 + $0x170] sm:$0xf]
    %v95 = vld [vmem:[%s1 + $0x174] sm:$0xff]
    %v96 = vld [vmem:[%s1 + $0x17c] sm:$0xf]
    %v97 = vld [vmem:[%s1 + $0x180] sm:$0xff]
    %v98 = vld [vmem:[%s1 + $0x188] sm:$0xf]
    %v99 = vld [vmem:[%s1 + $0x18c] sm:$0xff]
    %v100 = vld [vmem:[%s1 + $0x194] sm:$0xf]
    %v101 = vld [vmem:[%s1 + $0x198] sm:$0xff]
    %v102 = vld [vmem:[%s1 + $0x1a0] sm:$0xf]
    %v103 = vld [vmem:[%s1 + $0x1a4] sm:$0xff]
    %v104 = vld [vmem:[%s1 + $0x1ac] sm:$0xf]
    %v105 = vld [vmem:[%s1 + $0x1b0] sm:$0xff]
    %v106 = vld [vmem:[%s1 + $0x1b8] sm:$0xf]
    %v107 = vld [vmem:[%s1 + $0x1bc] sm:$0xff]
    %v108 = vld [vmem:[%s1 + $0x1c4] sm:$0xf]
    %v109 = vld [vmem:[%s1 + $0x1c8] sm:$0xff]
    %v110 = vld [vmem:[%s1 + $0x1d0] sm:$0xf]
    %v111 = vld [vmem:[%s1 + $0x1d4] sm:$0xff]
    %v112 = vld [vmem:[%s1 + $0x1dc] sm:$0xf]
    %v113 = vld [vmem:[%s1 + $0x1e0] sm:$0xff]
    %v114 = vld [vmem:[%s1 + $0x1e8] sm:$0xf]
    %v115 = vld [vmem:[%s1 + $0x1ec] sm:$0xff]
    %v116 = vld [vmem:[%s1 + $0x1f4] sm:$0xf]
    %v117 = vld [vmem:[%s1 + $0x1f8] sm:$0xff]
    %v118 = vld [vmem:[%s1 + $0x200] sm:$0xf]
    %v119 = vld [vmem:[%s1 + $0x204] sm:$0xff]
    %v120 = vld [vmem:[%s1 + $0x20c] sm:$0xf]
    %v121 = vld [vmem:[%s1 + $0x210] sm:$0xff]
    %v122 = vld [vmem:[%s1 + $0x218] sm:$0xf]
    %v123 = vld [vmem:[%s1 + $0x21c] sm:$0xff]
    %v124 = vld [vmem:[%s1 + $0x224] sm:$0xf]
    %v125 = vld [vmem:[%s1 + $0x228] sm:$0xff]
    %v126 = vld [vmem:[%s1 + $0x230] sm:$0xf]
    %v127 = vld [vmem:[%s1 + $0x234] sm:$0xff]
    %v128 = vld [vmem:[%s1 + $0x23c] sm:$0xf]
    %v129 = vld [vmem:[%s1 + $0x240] sm:$0xff]
    %v130 = vld [vmem:[%s1 + $0x248] sm:$0xf]
    %v131 = vld [vmem:[%s1 + $0x24c] sm:$0xff]
    %v132 = vld [vmem:[%s1 + $0x254] sm:$0xf]
    %v133 = vld [vmem:[%s1 + $0x258] sm:$0xff]
    %v134 = vld [vmem:[%s1 + $0x260] sm:$0xf]
    %v135 = vld [vmem:[%s1 + $0x264] sm:$0xff]
    %v136 = vld [vmem:[%s1 + $0x26c] sm:$0xf]
    %v137 = vld [vmem:[%s1 + $0x270] sm:$0xff]
    %v138 = vld [vmem:[%s1 + $0x278] sm:$0xf]
    %v139 = vld [vmem:[%s1 + $0x27c] sm:$0xff]
    %v140 = vld [vmem:[%s1 + $0x284] sm:$0xf]
    %v141 = vld [vmem:[%s1 + $0x288] sm:$0xff]
    %v142 = vld [vmem:[%s1 + $0x290] sm:$0xf]
    %v143 = vld [vmem:[%s1 + $0x294] sm:$0xff]
    %v144 = vld [vmem:[%s1 + $0x29c] sm:$0xf]
    %v145 = vld [vmem:[%s1 + $0x2a0] sm:$0xff]
    %v146 = vld [vmem:[%s1 + $0x2a8] sm:$0xf]
    %v147 = vld [vmem:[%s1 + $0x2ac] sm:$0x33]
    %v148 = vld [vmem:[%s1 + $0x2b4] sm:$0x3]
    %v149 = vld [vmem:[%s2] sm:$0x7]
    %v151 = vlaneseq
    %v152 = vshrl.u32 %v151, 7
    %v153 = vsub.s32 0, %v152
    %v154 = vrot.slane %v149, %v153
    %v155 = vlaneseq
    %v156 = vshrl.u32 %v155, 7
    %v157 = vsub.s32 1, %v156
    %v158 = vrot.slane %v149, %v157
    %v159 = vlaneseq
    %v160 = vshrl.u32 %v159, 7
    %v161 = vsub.s32 2, %v160
    %v162 = vrot.slane %v149, %v161
    %v168 = vunpack.c.l.b16 %v31
    %v169 = vunpack.c.h.b16 %v31
    %v170 = vunpack.c.l.b16 %v32
    %v171 = vunpack.c.h.b16 %v32
    %v172 = vpack.c.b16 %v168, %v168
    %v173 = vpack.c.b16 %v169, %v169
    %v174 = vpack.c.b16 %v170, %v170
    %v175 = vpack.c.b16 %v171, %v171
    %v295 = vunpack.c.l.b16 %v33
    %v296 = vunpack.c.h.b16 %v33
    %v297 = vunpack.c.l.b16 %v34
    %v298 = vunpack.c.l.b16 %v35
    %v299 = vunpack.c.h.b16 %v35
    %v300 = vunpack.c.l.b16 %v36
    %v301 = vunpack.c.l.b16 %v37
    %v302 = vunpack.c.h.b16 %v37
    %v303 = vunpack.c.l.b16 %v38
    %v304 = vunpack.c.l.b16 %v39
    %v305 = vunpack.c.h.b16 %v39
    %v306 = vunpack.c.l.b16 %v40
    %v307 = vunpack.c.l.b16 %v41
    %v308 = vunpack.c.h.b16 %v41
    %v309 = vunpack.c.l.b16 %v42
    %v310 = vunpack.c.l.b16 %v43
    %v311 = vunpack.c.h.b16 %v43
    %v312 = vunpack.c.l.b16 %v44
    %v313 = vunpack.c.l.b16 %v45
    %v314 = vunpack.c.h.b16 %v45
    %v315 = vunpack.c.l.b16 %v46
    %v316 = vunpack.c.l.b16 %v47
    %v317 = vunpack.c.h.b16 %v47
    %v318 = vunpack.c.l.b16 %v48
    %v319 = vunpack.c.l.b16 %v49
    %v320 = vunpack.c.h.b16 %v49
    %v321 = vunpack.c.l.b16 %v50
    %v322 = vunpack.c.l.b16 %v51
    %v323 = vunpack.c.h.b16 %v51
    %v324 = vunpack.c.l.b16 %v52
    %v325 = vunpack.c.l.b16 %v53
    %v326 = vunpack.c.h.b16 %v53
    %v327 = vunpack.c.l.b16 %v54
    %v328 = vunpack.c.l.b16 %v55
    %v329 = vunpack.c.h.b16 %v55
    %v330 = vunpack.c.l.b16 %v56
    %v331 = vunpack.c.l.b16 %v57
    %v332 = vunpack.c.h.b16 %v57
    %v333 = vunpack.c.l.b16 %v58
    %v334 = vunpack.c.l.b16 %v59
    %v335 = vunpack.c.h.b16 %v59
    %v336 = vunpack.c.l.b16 %v60
    %v337 = vunpack.c.l.b16 %v61
    %v338 = vunpack.c.h.b16 %v61
    %v339 = vunpack.c.l.b16 %v62
    %v340 = vunpack.c.l.b16 %v63
    %v341 = vunpack.c.h.b16 %v63
    %v342 = vunpack.c.l.b16 %v64
    %v343 = vunpack.c.l.b16 %v65
    %v344 = vunpack.c.h.b16 %v65
    %v345 = vunpack.c.l.b16 %v66
    %v346 = vunpack.c.l.b16 %v67
    %v347 = vunpack.c.h.b16 %v67
    %v348 = vunpack.c.l.b16 %v68
    %v349 = vunpack.c.l.b16 %v69
    %v350 = vunpack.c.h.b16 %v69
    %v351 = vunpack.c.l.b16 %v70
    %v352 = vunpack.c.l.b16 %v71
    %v353 = vunpack.c.h.b16 %v71
    %v354 = vunpack.c.l.b16 %v72
    %v355 = vunpack.c.l.b16 %v73
    %v356 = vunpack.c.h.b16 %v73
    %v357 = vunpack.c.l.b16 %v74
    %v358 = vunpack.c.l.b16 %v75
    %v359 = vunpack.c.h.b16 %v75
    %v360 = vunpack.c.l.b16 %v76
    %v361 = vunpack.c.l.b16 %v77
    %v362 = vunpack.c.h.b16 %v77
    %v363 = vunpack.c.l.b16 %v78
    %v364 = vunpack.c.l.b16 %v79
    %v365 = vunpack.c.h.b16 %v79
    %v366 = vunpack.c.l.b16 %v80
    %v367 = vunpack.c.l.b16 %v81
    %v368 = vunpack.c.h.b16 %v81
    %v369 = vunpack.c.l.b16 %v82
    %v370 = vunpack.c.l.b16 %v83
    %v371 = vunpack.c.h.b16 %v83
    %v372 = vunpack.c.l.b16 %v84
    %v373 = vunpack.c.l.b16 %v85
    %v374 = vunpack.c.h.b16 %v85
    %v375 = vunpack.c.l.b16 %v86
    %v376 = vunpack.c.l.b16 %v87
    %v377 = vunpack.c.h.b16 %v87
    %v378 = vunpack.c.l.b16 %v88
    %v379 = vunpack.c.l.b16 %v89
    %v380 = vunpack.c.h.b16 %v89
    %v381 = vunpack.c.l.b16 %v90
    %v382 = vunpack.c.l.b16 %v91
    %v383 = vunpack.c.h.b16 %v91
    %v384 = vunpack.c.l.b16 %v92
    %v385 = vunpack.c.l.b16 %v93
    %v386 = vunpack.c.h.b16 %v93
    %v387 = vunpack.c.l.b16 %v94
    %v388 = vunpack.c.l.b16 %v95
    %v389 = vunpack.c.h.b16 %v95
    %v390 = vunpack.c.l.b16 %v96
    %v391 = vunpack.c.l.b16 %v97
    %v392 = vunpack.c.h.b16 %v97
    %v393 = vunpack.c.l.b16 %v98
    %v394 = vunpack.c.l.b16 %v99
    %v395 = vunpack.c.h.b16 %v99
    %v396 = vunpack.c.l.b16 %v100
    %v397 = vunpack.c.l.b16 %v101
    %v398 = vunpack.c.h.b16 %v101
    %v399 = vunpack.c.l.b16 %v102
    %v400 = vunpack.c.l.b16 %v103
    %v401 = vunpack.c.h.b16 %v103
    %v402 = vunpack.c.l.b16 %v104
    %v403 = vunpack.c.l.b16 %v105
    %v404 = vunpack.c.h.b16 %v105
    %v405 = vunpack.c.l.b16 %v106
    %v406 = vunpack.c.l.b16 %v107
    %v407 = vunpack.c.h.b16 %v107
    %v408 = vunpack.c.l.b16 %v108
    %v409 = vunpack.c.l.b16 %v109
    %v410 = vunpack.c.h.b16 %v109
    %v411 = vunpack.c.l.b16 %v110
    %v412 = vunpack.c.l.b16 %v111
    %v413 = vunpack.c.h.b16 %v111
    %v414 = vunpack.c.l.b16 %v112
    %v415 = vunpack.c.l.b16 %v113
    %v416 = vunpack.c.h.b16 %v113
    %v417 = vunpack.c.l.b16 %v114
    %v418 = vunpack.c.l.b16 %v115
    %v419 = vunpack.c.h.b16 %v115
    %v420 = vunpack.c.l.b16 %v116
    %v421 = vunpack.c.l.b16 %v117
    %v422 = vunpack.c.h.b16 %v117
    %v423 = vunpack.c.l.b16 %v118
    %v424 = vunpack.c.l.b16 %v119
    %v425 = vunpack.c.h.b16 %v119
    %v426 = vunpack.c.l.b16 %v120
    %v427 = vunpack.c.l.b16 %v121
    %v428 = vunpack.c.h.b16 %v121
    %v429 = vunpack.c.l.b16 %v122
    %v430 = vunpack.c.l.b16 %v123
    %v431 = vunpack.c.h.b16 %v123
    %v432 = vunpack.c.l.b16 %v124
    %v433 = vunpack.c.l.b16 %v125
    %v434 = vunpack.c.h.b16 %v125
    %v435 = vunpack.c.l.b16 %v126
    %v436 = vunpack.c.l.b16 %v127
    %v437 = vunpack.c.h.b16 %v127
    %v438 = vunpack.c.l.b16 %v128
    %v439 = vunpack.c.l.b16 %v129
    %v440 = vunpack.c.h.b16 %v129
    %v441 = vunpack.c.l.b16 %v130
    %v442 = vunpack.c.l.b16 %v131
    %v443 = vunpack.c.h.b16 %v131
    %v444 = vunpack.c.l.b16 %v132
    %v445 = vunpack.c.l.b16 %v133
    %v446 = vunpack.c.h.b16 %v133
    %v447 = vunpack.c.l.b16 %v134
    %v448 = vunpack.c.l.b16 %v135
    %v449 = vunpack.c.h.b16 %v135
    %v450 = vunpack.c.l.b16 %v136
    %v451 = vunpack.c.l.b16 %v137
    %v452 = vunpack.c.h.b16 %v137
    %v453 = vunpack.c.l.b16 %v138
    %v454 = vunpack.c.l.b16 %v139
    %v455 = vunpack.c.h.b16 %v139
    %v456 = vunpack.c.l.b16 %v140
    %v457 = vunpack.c.l.b16 %v141
    %v458 = vunpack.c.h.b16 %v141
    %v459 = vunpack.c.l.b16 %v142
    %v460 = vunpack.c.l.b16 %v143
    %v461 = vunpack.c.h.b16 %v143
    %v462 = vunpack.c.l.b16 %v144
    %v463 = vunpack.c.l.b16 %v145
    %v464 = vunpack.c.h.b16 %v145
    %v465 = vunpack.c.l.b16 %v146
    %v466 = vunpack.c.l.b16 %v147
    %v467 = vunpack.c.h.b16 %v147
    %v468 = vunpack.c.l.b16 %v148
    %v469 = vpack.c.b16 %v298, %v295
    %v470 = vpack.c.b16 %v299, %v296
    %v471 = vpack.c.b16 %v300, %v297
    %v472 = vpack.c.b16 %v304, %v301
    %v473 = vpack.c.b16 %v305, %v302
    %v474 = vpack.c.b16 %v306, %v303
    %v475 = vpack.c.b16 %v310, %v307
    %v476 = vpack.c.b16 %v311, %v308
    %v477 = vpack.c.b16 %v312, %v309
    %v478 = vpack.c.b16 %v316, %v313
    %v479 = vpack.c.b16 %v317, %v314
    %v480 = vpack.c.b16 %v318, %v315
    %v481 = vpack.c.b16 %v322, %v319
    %v482 = vpack.c.b16 %v323, %v320
    %v483 = vpack.c.b16 %v324, %v321
    %v484 = vpack.c.b16 %v328, %v325
    %v485 = vpack.c.b16 %v329, %v326
    %v486 = vpack.c.b16 %v330, %v327
    %v487 = vpack.c.b16 %v334, %v331
    %v488 = vpack.c.b16 %v335, %v332
    %v489 = vpack.c.b16 %v336, %v333
    %v490 = vpack.c.b16 %v340, %v337
    %v491 = vpack.c.b16 %v341, %v338
    %v492 = vpack.c.b16 %v342, %v339
    %v493 = vpack.c.b16 %v346, %v343
    %v494 = vpack.c.b16 %v347, %v344
    %v495 = vpack.c.b16 %v348, %v345
    %v496 = vpack.c.b16 %v352, %v349
    %v497 = vpack.c.b16 %v353, %v350
    %v498 = vpack.c.b16 %v354, %v351
    %v499 = vpack.c.b16 %v358, %v355
    %v500 = vpack.c.b16 %v359, %v356
    %v501 = vpack.c.b16 %v360, %v357
    %v502 = vpack.c.b16 %v364, %v361
    %v503 = vpack.c.b16 %v365, %v362
    %v504 = vpack.c.b16 %v366, %v363
    %v505 = vpack.c.b16 %v370, %v367
    %v506 = vpack.c.b16 %v371, %v368
    %v507 = vpack.c.b16 %v372, %v369
    %v508 = vpack.c.b16 %v376, %v373
    %v509 = vpack.c.b16 %v377, %v374
    %v510 = vpack.c.b16 %v378, %v375
    %v511 = vpack.c.b16 %v382, %v379
    %v512 = vpack.c.b16 %v383, %v380
    %v513 = vpack.c.b16 %v384, %v381
    %v514 = vpack.c.b16 %v388, %v385
    %v515 = vpack.c.b16 %v389, %v386
    %v516 = vpack.c.b16 %v390, %v387
    %v517 = vpack.c.b16 %v394, %v391
    %v518 = vpack.c.b16 %v395, %v392
    %v519 = vpack.c.b16 %v396, %v393
    %v520 = vpack.c.b16 %v400, %v397
    %v521 = vpack.c.b16 %v401, %v398
    %v522 = vpack.c.b16 %v402, %v399
    %v523 = vpack.c.b16 %v406, %v403
    %v524 = vpack.c.b16 %v407, %v404
    %v525 = vpack.c.b16 %v408, %v405
    %v526 = vpack.c.b16 %v412, %v409
    %v527 = vpack.c.b16 %v413, %v410
    %v528 = vpack.c.b16 %v414, %v411
    %v529 = vpack.c.b16 %v418, %v415
    %v530 = vpack.c.b16 %v419, %v416
    %v531 = vpack.c.b16 %v420, %v417
    %v532 = vpack.c.b16 %v424, %v421
    %v533 = vpack.c.b16 %v425, %v422
    %v534 = vpack.c.b16 %v426, %v423
    %v535 = vpack.c.b16 %v430, %v427
    %v536 = vpack.c.b16 %v431, %v428
    %v537 = vpack.c.b16 %v432, %v429
    %v538 = vpack.c.b16 %v436, %v433
    %v539 = vpack.c.b16 %v437, %v434
    %v540 = vpack.c.b16 %v438, %v435
    %v541 = vpack.c.b16 %v442, %v439
    %v542 = vpack.c.b16 %v443, %v440
    %v543 = vpack.c.b16 %v444, %v441
    %v544 = vpack.c.b16 %v448, %v445
    %v545 = vpack.c.b16 %v449, %v446
    %v546 = vpack.c.b16 %v450, %v447
    %v547 = vpack.c.b16 %v454, %v451
    %v548 = vpack.c.b16 %v455, %v452
    %v549 = vpack.c.b16 %v456, %v453
    %v550 = vpack.c.b16 %v460, %v457
    %v551 = vpack.c.b16 %v461, %v458
    %v552 = vpack.c.b16 %v462, %v459
    %v553 = vpack.c.b16 %v466, %v463
    %v554 = vpack.c.b16 %v467, %v464
    %v555 = vpack.c.b16 %v468, %v465
    %vm640 = vcmask 621568
    %v642 = vsel %vm640, %v175, 0
    %vm644 = vcmask 1045504
    %v646 = vsel %vm644, %v553, 0
    %v649 = vsel %vm644, %v554, 0
    %v652 = vsel %vm644, %v555, 0
    %654 = vmatprep.subr.bf16.mxu0 %v491
    %655 = vmatpush1.bf16.msra.mxu0 %v490
    %656 = vmatprep.subr.bf16.mxu0 %v488
    %657 = vmatpush1.bf16.msra.mxu0 %v487
    %658 = vmatprep.subr.bf16.mxu0 %v485
    %659 = vmatpush1.bf16.msra.mxu0 %v484
    %660 = vmatprep.subr.bf16.mxu0 %v482
    %661 = vmatpush1.bf16.msra.mxu0 %v481
    %662 = vmatprep.subr.bf16.mxu0 %v479
    %663 = vmatpush1.bf16.msra.mxu0 %v478
    %664 = vmatprep.subr.bf16.mxu0 %v476
    %665 = vmatpush1.bf16.msra.mxu0 %v475
    %666 = vmatprep.subr.bf16.mxu0 %v473
    %667 = vmatpush1.bf16.msra.mxu0 %v472
    %668 = vmatprep.subr.bf16.mxu0 %v470
    %669 = vmatpush1.bf16.msra.mxu0 %v469
    %670 = vmatprep.subr.bf16.mxu0 %v515
    %671 = vmatpush2.bf16.msra.mxu0 %v514
    %672 = vmatprep.subr.bf16.mxu0 %v512
    %673 = vmatpush2.bf16.msra.mxu0 %v511
    %674 = vmatprep.subr.bf16.mxu0 %v509
    %675 = vmatpush2.bf16.msra.mxu0 %v508
    %676 = vmatprep.subr.bf16.mxu0 %v506
    %677 = vmatpush2.bf16.msra.mxu0 %v505
    %678 = vmatprep.subr.bf16.mxu0 %v503
    %679 = vmatpush2.bf16.msra.mxu0 %v502
    %680 = vmatprep.subr.bf16.mxu0 %v500
    %681 = vmatpush2.bf16.msra.mxu0 %v499
    %682 = vmatprep.subr.bf16.mxu0 %v497
    %683 = vmatpush2.bf16.msra.mxu0 %v496
    %684 = vmatprep.subr.bf16.mxu0 %v494
    %685 = vmatpush2.bf16.msra.mxu0 %v493
    %686 = vmatprep.mubr.bf16.mxu0 %v173
    %687 = vmatmul.mubr.bf16.gmra.mxu0 %v172
    %v688 = vpop.f32.mrf.mxu0
    %v689 = vadd.f32 %v154, %v688
    %v690 = vpop.f32.mrf.mxu0
    %v691 = vadd.f32 %v158, %v690
    %v692 = vpop.f32.mrf.mxu0
    %v693 = vpop.f32.mrf.mxu0
    %694 = vdwg.mxu0
    %695 = vmatprep.subr.bf16.mxu0 %v539
    %696 = vmatpush1.bf16.msra.mxu0 %v538
    %697 = vmatprep.subr.bf16.mxu0 %v536
    %698 = vmatpush1.bf16.msra.mxu0 %v535
    %699 = vmatprep.subr.bf16.mxu0 %v533
    %700 = vmatpush1.bf16.msra.mxu0 %v532
    %701 = vmatprep.subr.bf16.mxu0 %v530
    %702 = vmatpush1.bf16.msra.mxu0 %v529
    %703 = vmatprep.subr.bf16.mxu0 %v527
    %704 = vmatpush1.bf16.msra.mxu0 %v526
    %705 = vmatprep.subr.bf16.mxu0 %v524
    %706 = vmatpush1.bf16.msra.mxu0 %v523
    %707 = vmatprep.subr.bf16.mxu0 %v521
    %708 = vmatpush1.bf16.msra.mxu0 %v520
    %709 = vmatprep.subr.bf16.mxu0 %v518
    %710 = vmatpush1.bf16.msra.mxu0 %v517
    %711 = vmatprep.subr.bf16.mxu0 0
    %712 = vmatpush2.bf16.msra.mxu0 0
    %713 = vmatprep.subr.bf16.mxu0 0
    %714 = vmatpush2.bf16.msra.mxu0 0
    %715 = vmatprep.subr.bf16.mxu0 0
    %716 = vmatpush2.bf16.msra.mxu0 0
    %717 = vmatprep.subr.bf16.mxu0 %v649
    %718 = vmatpush2.bf16.msra.mxu0 %v646
    %719 = vmatprep.subr.bf16.mxu0 %v551
    %720 = vmatpush2.bf16.msra.mxu0 %v550
    %721 = vmatprep.subr.bf16.mxu0 %v548
    %722 = vmatpush2.bf16.msra.mxu0 %v547
    %723 = vmatprep.subr.bf16.mxu0 %v545
    %724 = vmatpush2.bf16.msra.mxu0 %v544
    %725 = vmatprep.subr.bf16.mxu0 %v542
    %726 = vmatpush2.bf16.msra.mxu0 %v541
    %727 = vmatprep.mubr.bf16.mxu0 %v642
    %728 = vmatmul.mubr.bf16.gmra.mxu0 %v174
    %v729 = vpop.f32.mrf.mxu0
    %v730 = vadd.f32 %v689, %v729
    %v731 = vpop.f32.mrf.mxu0
    %v732 = vadd.f32 %v691, %v731
    %v733 = vpop.f32.mrf.mxu0
    %v734 = vpop.f32.mrf.mxu0
    %735 = vdwg.mxu0
    %736 = vmatprep.subr.bf16.mxu0 0
    %737 = vmatpush1.bf16.msra.mxu0 %v492
    %738 = vmatprep.subr.bf16.mxu0 0
    %739 = vmatpush1.bf16.msra.mxu0 %v489
    %740 = vmatprep.subr.bf16.mxu0 0
    %741 = vmatpush1.bf16.msra.mxu0 %v486
    %742 = vmatprep.subr.bf16.mxu0 0
    %743 = vmatpush1.bf16.msra.mxu0 %v483
    %744 = vmatprep.subr.bf16.mxu0 0
    %745 = vmatpush1.bf16.msra.mxu0 %v480
    %746 = vmatprep.subr.bf16.mxu0 0
    %747 = vmatpush1.bf16.msra.mxu0 %v477
    %748 = vmatprep.subr.bf16.mxu0 0
    %749 = vmatpush1.bf16.msra.mxu0 %v474
    %750 = vmatprep.subr.bf16.mxu0 0
    %751 = vmatpush1.bf16.msra.mxu0 %v471
    %752 = vmatprep.subr.bf16.mxu0 0
    %753 = vmatpush2.bf16.msra.mxu0 %v516
    %754 = vmatprep.subr.bf16.mxu0 0
    %755 = vmatpush2.bf16.msra.mxu0 %v513
    %756 = vmatprep.subr.bf16.mxu0 0
    %757 = vmatpush2.bf16.msra.mxu0 %v510
    %758 = vmatprep.subr.bf16.mxu0 0
    %759 = vmatpush2.bf16.msra.mxu0 %v507
    %760 = vmatprep.subr.bf16.mxu0 0
    %761 = vmatpush2.bf16.msra.mxu0 %v504
    %762 = vmatprep.subr.bf16.mxu0 0
    %763 = vmatpush2.bf16.msra.mxu0 %v501
    %764 = vmatprep.subr.bf16.mxu0 0
    %765 = vmatpush2.bf16.msra.mxu0 %v498
    %766 = vmatprep.subr.bf16.mxu0 0
    %767 = vmatpush2.bf16.msra.mxu0 %v495
    %768 = vmatprep.mubr.bf16.mxu0 %v173
    %769 = vmatmul.mubr.bf16.gmra.mxu0 %v172
    %v770 = vpop.f32.mrf.mxu0
    %v771 = vadd.f32 %v162, %v770
    %v772 = vpop.f32.mrf.mxu0
    %v773 = vpop.f32.mrf.mxu0
    %v774 = vpop.f32.mrf.mxu0
    %775 = vdwg.mxu0
    %776 = vmatprep.subr.bf16.mxu0 0
    %777 = vmatpush1.bf16.msra.mxu0 %v540
    %778 = vmatprep.subr.bf16.mxu0 0
    %779 = vmatpush1.bf16.msra.mxu0 %v537
    %780 = vmatprep.subr.bf16.mxu0 0
    %781 = vmatpush1.bf16.msra.mxu0 %v534
    %782 = vmatprep.subr.bf16.mxu0 0
    %783 = vmatpush1.bf16.msra.mxu0 %v531
    %784 = vmatprep.subr.bf16.mxu0 0
    %785 = vmatpush1.bf16.msra.mxu0 %v528
    %786 = vmatprep.subr.bf16.mxu0 0
    %787 = vmatpush1.bf16.msra.mxu0 %v525
    %788 = vmatprep.subr.bf16.mxu0 0
    %789 = vmatpush1.bf16.msra.mxu0 %v522
    %790 = vmatprep.subr.bf16.mxu0 0
    %791 = vmatpush1.bf16.msra.mxu0 %v519
    %792 = vmatprep.subr.bf16.mxu0 0
    %793 = vmatpush2.bf16.msra.mxu0 0
    %794 = vmatprep.subr.bf16.mxu0 0
    %795 = vmatpush2.bf16.msra.mxu0 0
    %796 = vmatprep.subr.bf16.mxu0 0
    %797 = vmatpush2.bf16.msra.mxu0 0
    %798 = vmatprep.subr.bf16.mxu0 0
    %799 = vmatpush2.bf16.msra.mxu0 %v652
    %800 = vmatprep.subr.bf16.mxu0 0
    %801 = vmatpush2.bf16.msra.mxu0 %v552
    %802 = vmatprep.subr.bf16.mxu0 0
    %803 = vmatpush2.bf16.msra.mxu0 %v549
    %804 = vmatprep.subr.bf16.mxu0 0
    %805 = vmatpush2.bf16.msra.mxu0 %v546
    %806 = vmatprep.subr.bf16.mxu0 0
    %807 = vmatpush2.bf16.msra.mxu0 %v543
    %808 = vmatprep.mubr.bf16.mxu0 %v642
    %809 = vmatmul.mubr.bf16.gmra.mxu0 %v174
    %v810 = vpop.f32.mrf.mxu0
    %v811 = vadd.f32 %v771, %v810
    %v812 = vpop.f32.mrf.mxu0
    %v813 = vpop.f32.mrf.mxu0
    %v814 = vpop.f32.mrf.mxu0
    %815 = vdwg.mxu0
    %v816 = vld [vmem:[%s3] sm:$0xff]
    %v817 = vld [vmem:[%s3 + $0x8] sm:$0xff]
    %v818 = vld [vmem:[%s3 + $0x10] sm:$0xff]
    %v819 = vld [vmem:[%s3 + $0x18] sm:$0xff]
    %v820 = vld [vmem:[%s3 + $0x20] sm:$0xff]
    %v821 = vld [vmem:[%s3 + $0x28] sm:$0xff]
    %v822 = vld [vmem:[%s3 + $0x30] sm:$0xff]
    %v823 = vld [vmem:[%s3 + $0x38] sm:$0xff]
    %v824 = vld [vmem:[%s4] sm:$0xff]
    %v825 = vld [vmem:[%s4 + $0x8] sm:$0xff]
    %v826 = vld [vmem:[%s4 + $0x10] sm:$0xff]
    %v827 = vld [vmem:[%s4 + $0x18] sm:$0xff]
    %v828 = vld [vmem:[%s5] sm:$0x1]
    %vm829 = vcmask 523264
    %v831 = vsel %vm829, 0.0, 0
    %833 = vmatprep.subr.mxu0 0.0
    %834 = vmatpush1.msra.mxu0 0.0
    %835 = vmatprep.subr.mxu0 0.0
    %836 = vmatpush1.msra.mxu0 0.0
    %837 = vmatprep.subr.mxu0 0.0
    %838 = vmatpush1.msra.mxu0 0.0
    %839 = vmatprep.subr.mxu0 0.0
    %840 = vmatpush1.msra.mxu0 0.0
    %841 = vmatprep.subr.mxu0 0.0
    %842 = vmatpush1.msra.mxu0 0.0
    %843 = vmatprep.subr.mxu0 0.0
    %844 = vmatpush1.msra.mxu0 0.0
    %845 = vmatprep.subr.mxu0 0.0
    %846 = vmatpush1.msra.mxu0 0.0
    %847 = vmatprep.subr.mxu0 0.0
    %848 = vmatpush1.msra.mxu0 0.0
    %849 = vmatprep.subr.mxu0 0.0
    %850 = vmatpush1.msra.mxu0 %v823
    %851 = vmatprep.subr.mxu0 0.0
    %852 = vmatpush1.msra.mxu0 %v822
    %853 = vmatprep.subr.mxu0 0.0
    %854 = vmatpush1.msra.mxu0 %v821
    %855 = vmatprep.subr.mxu0 0.0
    %856 = vmatpush1.msra.mxu0 %v820
    %857 = vmatprep.subr.mxu0 0.0
    %858 = vmatpush1.msra.mxu0 %v819
    %859 = vmatprep.subr.mxu0 0.0
    %860 = vmatpush1.msra.mxu0 %v818
    %861 = vmatprep.subr.mxu0 0.0
    %862 = vmatpush1.msra.mxu0 %v817
    %863 = vmatprep.subr.mxu0 0.0
    %864 = vmatpush1.msra.mxu0 %v816
    %865 = vmatprep.subr.mxu0 0.0
    %866 = vmatpush2.msra.mxu0 0.0
    %867 = vmatprep.subr.mxu0 0.0
    %868 = vmatpush2.msra.mxu0 0.0
    %869 = vmatprep.subr.mxu0 0.0
    %870 = vmatpush2.msra.mxu0 0.0
    %871 = vmatprep.subr.mxu0 0.0
    %872 = vmatpush2.msra.mxu0 0.0
    %873 = vmatprep.subr.mxu0 0.0
    %874 = vmatpush2.msra.mxu0 0.0
    %875 = vmatprep.subr.mxu0 0.0
    %876 = vmatpush2.msra.mxu0 0.0
    %877 = vmatprep.subr.mxu0 0.0
    %878 = vmatpush2.msra.mxu0 0.0
    %879 = vmatprep.subr.mxu0 0.0
    %880 = vmatpush2.msra.mxu0 0.0
    %881 = vmatprep.subr.mxu0 0.0
    %882 = vmatpush2.msra.mxu0 0.0
    %883 = vmatprep.subr.mxu0 0.0
    %884 = vmatpush2.msra.mxu0 0.0
    %885 = vmatprep.subr.mxu0 0.0
    %886 = vmatpush2.msra.mxu0 0.0
    %887 = vmatprep.subr.mxu0 0.0
    %888 = vmatpush2.msra.mxu0 0.0
    %889 = vmatprep.subr.mxu0 0.0
    %890 = vmatpush2.msra.mxu0 0.0
    %891 = vmatprep.subr.mxu0 0.0
    %892 = vmatpush2.msra.mxu0 0.0
    %893 = vmatprep.subr.mxu0 0.0
    %894 = vmatpush2.msra.mxu0 0.0
    %895 = vmatprep.subr.mxu0 0.0
    %896 = vmatpush2.msra.mxu0 0.0
    %897 = vmatprep.mubr.f32.mxu0 0.0
    %898 = vmatmul.mubr.f32.gmra.mxu0 %v831
    %v899 = vpop.f32.mrf.mxu0
    %v900 = vadd.f32 0.0, %v899
    %v901 = vpop.f32.mrf.mxu0
    %902 = vdwg.mxu0
    %v903 = vadd.f32 %v730, %v900
    %v904 = vtanh.pop %v903
    %v906 = vlaneseq
    %v907 = vshrl.u32 %v906, 7
    %v908 = vsub.s32 0, %v907
    %v909 = vrot.slane %v828, %v908
    %vm911 = vcmask 261120
    %v913 = vsel %vm911, %v904, 0
    %915 = vmatprep.subr.mxu0 0.0
    %916 = vmatpush1.msra.mxu0 0.0
    %917 = vmatprep.subr.mxu0 0.0
    %918 = vmatpush1.msra.mxu0 0.0
    %919 = vmatprep.subr.mxu0 0.0
    %920 = vmatpush1.msra.mxu0 0.0
    %921 = vmatprep.subr.mxu0 0.0
    %922 = vmatpush1.msra.mxu0 0.0
    %923 = vmatprep.subr.mxu0 0.0
    %924 = vmatpush1.msra.mxu0 0.0
    %925 = vmatprep.subr.mxu0 0.0
    %926 = vmatpush1.msra.mxu0 0.0
    %927 = vmatprep.subr.mxu0 0.0
    %928 = vmatpush1.msra.mxu0 0.0
    %929 = vmatprep.subr.mxu0 0.0
    %930 = vmatpush1.msra.mxu0 0.0
    %931 = vmatprep.subr.mxu0 0.0
    %932 = vmatpush1.msra.mxu0 0.0
    %933 = vmatprep.subr.mxu0 0.0
    %934 = vmatpush1.msra.mxu0 0.0
    %935 = vmatprep.subr.mxu0 0.0
    %936 = vmatpush1.msra.mxu0 0.0
    %937 = vmatprep.subr.mxu0 0.0
    %938 = vmatpush1.msra.mxu0 0.0
    %939 = vmatprep.subr.mxu0 0.0
    %940 = vmatpush1.msra.mxu0 %v827
    %941 = vmatprep.subr.mxu0 0.0
    %942 = vmatpush1.msra.mxu0 %v826
    %943 = vmatprep.subr.mxu0 0.0
    %944 = vmatpush1.msra.mxu0 %v825
    %945 = vmatprep.subr.mxu0 0.0
    %946 = vmatpush1.msra.mxu0 %v824
    %947 = vmatprep.subr.mxu0 0.0
    %948 = vmatpush2.msra.mxu0 0.0
    %949 = vmatprep.subr.mxu0 0.0
    %950 = vmatpush2.msra.mxu0 0.0
    %951 = vmatprep.subr.mxu0 0.0
    %952 = vmatpush2.msra.mxu0 0.0
    %953 = vmatprep.subr.mxu0 0.0
    %954 = vmatpush2.msra.mxu0 0.0
    %955 = vmatprep.subr.mxu0 0.0
    %956 = vmatpush2.msra.mxu0 0.0
    %957 = vmatprep.subr.mxu0 0.0
    %958 = vmatpush2.msra.mxu0 0.0
    %959 = vmatprep.subr.mxu0 0.0
    %960 = vmatpush2.msra.mxu0 0.0
    %961 = vmatprep.subr.mxu0 0.0
    %962 = vmatpush2.msra.mxu0 0.0
    %963 = vmatprep.subr.mxu0 0.0
    %964 = vmatpush2.msra.mxu0 0.0
    %965 = vmatprep.subr.mxu0 0.0
    %966 = vmatpush2.msra.mxu0 0.0
    %967 = vmatprep.subr.mxu0 0.0
    %968 = vmatpush2.msra.mxu0 0.0
    %969 = vmatprep.subr.mxu0 0.0
    %970 = vmatpush2.msra.mxu0 0.0
    %971 = vmatprep.subr.mxu0 0.0
    %972 = vmatpush2.msra.mxu0 0.0
    %973 = vmatprep.subr.mxu0 0.0
    %974 = vmatpush2.msra.mxu0 0.0
    %975 = vmatprep.subr.mxu0 0.0
    %976 = vmatpush2.msra.mxu0 0.0
    %977 = vmatprep.subr.mxu0 0.0
    %978 = vmatpush2.msra.mxu0 0.0
    %979 = vmatprep.mubr.f32.mxu0 0.0
    %980 = vmatmul.mubr.f32.gmra.mxu0 %v913
    %v981 = vpop.f32.mrf.mxu0
    %v982 = vadd.f32 %v909, %v981
    %v983 = vpop.f32.mrf.mxu0
    %984 = vdwg.mxu0
    %986 = vrot.lane.b32.xlu0 %v900, 96
    %v987 = vpop.permute.xlu0 %986
    %v989 = vadd.f32 %v982, %v987
    %v990 = vtanh.pop %v989
    %992 = vrot.lane.b32.xlu0 %v990, 32
    %v993 = vpop.permute.xlu0 %992
    %v995 = vsel %vm911, %v904, %v993
    %v997 = vsel %vm829, %v995, 0
    %999 = vmatprep.subr.mxu0 0.0
    %1000 = vmatpush1.msra.mxu0 0.0
    %1001 = vmatprep.subr.mxu0 0.0
    %1002 = vmatpush1.msra.mxu0 0.0
    %1003 = vmatprep.subr.mxu0 0.0
    %1004 = vmatpush1.msra.mxu0 0.0
    %1005 = vmatprep.subr.mxu0 0.0
    %1006 = vmatpush1.msra.mxu0 0.0
    %1007 = vmatprep.subr.mxu0 0.0
    %1008 = vmatpush1.msra.mxu0 0.0
    %1009 = vmatprep.subr.mxu0 0.0
    %1010 = vmatpush1.msra.mxu0 0.0
    %1011 = vmatprep.subr.mxu0 0.0
    %1012 = vmatpush1.msra.mxu0 0.0
    %1013 = vmatprep.subr.mxu0 0.0
    %1014 = vmatpush1.msra.mxu0 0.0
    %1015 = vmatprep.subr.mxu0 0.0
    %1016 = vmatpush1.msra.mxu0 %v823
    %1017 = vmatprep.subr.mxu0 0.0
    %1018 = vmatpush1.msra.mxu0 %v822
    %1019 = vmatprep.subr.mxu0 0.0
    %1020 = vmatpush1.msra.mxu0 %v821
    %1021 = vmatprep.subr.mxu0 0.0
    %1022 = vmatpush1.msra.mxu0 %v820
    %1023 = vmatprep.subr.mxu0 0.0
    %1024 = vmatpush1.msra.mxu0 %v819
    %1025 = vmatprep.subr.mxu0 0.0
    %1026 = vmatpush1.msra.mxu0 %v818
    %1027 = vmatprep.subr.mxu0 0.0
    %1028 = vmatpush1.msra.mxu0 %v817
    %1029 = vmatprep.subr.mxu0 0.0
    %1030 = vmatpush1.msra.mxu0 %v816
    %1031 = vmatprep.subr.mxu0 0.0
    %1032 = vmatpush2.msra.mxu0 0.0
    %1033 = vmatprep.subr.mxu0 0.0
    %1034 = vmatpush2.msra.mxu0 0.0
    %1035 = vmatprep.subr.mxu0 0.0
    %1036 = vmatpush2.msra.mxu0 0.0
    %1037 = vmatprep.subr.mxu0 0.0
    %1038 = vmatpush2.msra.mxu0 0.0
    %1039 = vmatprep.subr.mxu0 0.0
    %1040 = vmatpush2.msra.mxu0 0.0
    %1041 = vmatprep.subr.mxu0 0.0
    %1042 = vmatpush2.msra.mxu0 0.0
    %1043 = vmatprep.subr.mxu0 0.0
    %1044 = vmatpush2.msra.mxu0 0.0
    %1045 = vmatprep.subr.mxu0 0.0
    %1046 = vmatpush2.msra.mxu0 0.0
    %1047 = vmatprep.subr.mxu0 0.0
    %1048 = vmatpush2.msra.mxu0 0.0
    %1049 = vmatprep.subr.mxu0 0.0
    %1050 = vmatpush2.msra.mxu0 0.0
    %1051 = vmatprep.subr.mxu0 0.0
    %1052 = vmatpush2.msra.mxu0 0.0
    %1053 = vmatprep.subr.mxu0 0.0
    %1054 = vmatpush2.msra.mxu0 0.0
    %1055 = vmatprep.subr.mxu0 0.0
    %1056 = vmatpush2.msra.mxu0 0.0
    %1057 = vmatprep.subr.mxu0 0.0
    %1058 = vmatpush2.msra.mxu0 0.0
    %1059 = vmatprep.subr.mxu0 0.0
    %1060 = vmatpush2.msra.mxu0 0.0
    %1061 = vmatprep.subr.mxu0 0.0
    %1062 = vmatpush2.msra.mxu0 0.0
    %1063 = vmatprep.mubr.f32.mxu0 0.0
    %1064 = vmatmul.mubr.f32.gmra.mxu0 %v997
    %v1065 = vpop.f32.mrf.mxu0
    %v1066 = vadd.f32 0.0, %v1065
    %v1067 = vpop.f32.mrf.mxu0
    %1068 = vdwg.mxu0
    %1070 = vrot.lane.b32.xlu0 %v1066, 32
    %v1071 = vpop.permute.xlu0 %1070
    %v1073 = vadd.f32 %v730, %v1071
    %v1074 = vtanh.pop %v1073
    %1076 = vrot.lane.b32.xlu0 %v1074, 96
    %v1077 = vpop.permute.xlu0 %1076
    %v1078 = vsel %vm911, %v1077, 0
    %1080 = vmatprep.subr.mxu0 0.0
    %1081 = vmatpush1.msra.mxu0 0.0
    %1082 = vmatprep.subr.mxu0 0.0
    %1083 = vmatpush1.msra.mxu0 0.0
    %1084 = vmatprep.subr.mxu0 0.0
    %1085 = vmatpush1.msra.mxu0 0.0
    %1086 = vmatprep.subr.mxu0 0.0
    %1087 = vmatpush1.msra.mxu0 0.0
    %1088 = vmatprep.subr.mxu0 0.0
    %1089 = vmatpush1.msra.mxu0 0.0
    %1090 = vmatprep.subr.mxu0 0.0
    %1091 = vmatpush1.msra.mxu0 0.0
    %1092 = vmatprep.subr.mxu0 0.0
    %1093 = vmatpush1.msra.mxu0 0.0
    %1094 = vmatprep.subr.mxu0 0.0
    %1095 = vmatpush1.msra.mxu0 0.0
    %1096 = vmatprep.subr.mxu0 0.0
    %1097 = vmatpush1.msra.mxu0 0.0
    %1098 = vmatprep.subr.mxu0 0.0
    %1099 = vmatpush1.msra.mxu0 0.0
    %1100 = vmatprep.subr.mxu0 0.0
    %1101 = vmatpush1.msra.mxu0 0.0
    %1102 = vmatprep.subr.mxu0 0.0
    %1103 = vmatpush1.msra.mxu0 0.0
    %1104 = vmatprep.subr.mxu0 0.0
    %1105 = vmatpush1.msra.mxu0 %v827
    %1106 = vmatprep.subr.mxu0 0.0
    %1107 = vmatpush1.msra.mxu0 %v826
    %1108 = vmatprep.subr.mxu0 0.0
    %1109 = vmatpush1.msra.mxu0 %v825
    %1110 = vmatprep.subr.mxu0 0.0
    %1111 = vmatpush1.msra.mxu0 %v824
    %1112 = vmatprep.subr.mxu0 0.0
    %1113 = vmatpush2.msra.mxu0 0.0
    %1114 = vmatprep.subr.mxu0 0.0
    %1115 = vmatpush2.msra.mxu0 0.0
    %1116 = vmatprep.subr.mxu0 0.0
    %1117 = vmatpush2.msra.mxu0 0.0
    %1118 = vmatprep.subr.mxu0 0.0
    %1119 = vmatpush2.msra.mxu0 0.0
    %1120 = vmatprep.subr.mxu0 0.0
    %1121 = vmatpush2.msra.mxu0 0.0
    %1122 = vmatprep.subr.mxu0 0.0
    %1123 = vmatpush2.msra.mxu0 0.0
    %1124 = vmatprep.subr.mxu0 0.0
    %1125 = vmatpush2.msra.mxu0 0.0
    %1126 = vmatprep.subr.mxu0 0.0
    %1127 = vmatpush2.msra.mxu0 0.0
    %1128 = vmatprep.subr.mxu0 0.0
    %1129 = vmatpush2.msra.mxu0 0.0
    %1130 = vmatprep.subr.mxu0 0.0
    %1131 = vmatpush2.msra.mxu0 0.0
    %1132 = vmatprep.subr.mxu0 0.0
    %1133 = vmatpush2.msra.mxu0 0.0
    %1134 = vmatprep.subr.mxu0 0.0
    %1135 = vmatpush2.msra.mxu0 0.0
    %1136 = vmatprep.subr.mxu0 0.0
    %1137 = vmatpush2.msra.mxu0 0.0
    %1138 = vmatprep.subr.mxu0 0.0
    %1139 = vmatpush2.msra.mxu0 0.0
    %1140 = vmatprep.subr.mxu0 0.0
    %1141 = vmatpush2.msra.mxu0 0.0
    %1142 = vmatprep.subr.mxu0 0.0
    %1143 = vmatpush2.msra.mxu0 0.0
    %1144 = vmatprep.mubr.f32.mxu0 0.0
    %1145 = vmatmul.mubr.f32.gmra.mxu0 %v1078
    %v1146 = vpop.f32.mrf.mxu0
    %v1147 = vadd.f32 %v909, %v1146
    %v1148 = vpop.f32.mrf.mxu0
    %1149 = vdwg.mxu0
    %1150 = vrot.lane.b32.xlu0 %v1066, 96
    %v1151 = vpop.permute.xlu0 %1150
    %v1153 = vadd.f32 %v1147, %v1151
    %v1154 = vtanh.pop %v1153
    %1157 = vrot.lane.b32.xlu0 %v1154, 32
    %v1158 = vpop.permute.xlu0 %1157
    %v1160 = vsel %vm911, %v1077, %v1158
    %v1162 = vsel %vm829, %v1160, 0
    %1164 = vmatprep.subr.mxu0 0.0
    %1165 = vmatpush1.msra.mxu0 0.0
    %1166 = vmatprep.subr.mxu0 0.0
    %1167 = vmatpush1.msra.mxu0 0.0
    %1168 = vmatprep.subr.mxu0 0.0
    %1169 = vmatpush1.msra.mxu0 0.0
    %1170 = vmatprep.subr.mxu0 0.0
    %1171 = vmatpush1.msra.mxu0 0.0
    %1172 = vmatprep.subr.mxu0 0.0
    %1173 = vmatpush1.msra.mxu0 0.0
    %1174 = vmatprep.subr.mxu0 0.0
    %1175 = vmatpush1.msra.mxu0 0.0
    %1176 = vmatprep.subr.mxu0 0.0
    %1177 = vmatpush1.msra.mxu0 0.0
    %1178 = vmatprep.subr.mxu0 0.0
    %1179 = vmatpush1.msra.mxu0 0.0
    %1180 = vmatprep.subr.mxu0 0.0
    %1181 = vmatpush1.msra.mxu0 %v823
    %1182 = vmatprep.subr.mxu0 0.0
    %1183 = vmatpush1.msra.mxu0 %v822
    %1184 = vmatprep.subr.mxu0 0.0
    %1185 = vmatpush1.msra.mxu0 %v821
    %1186 = vmatprep.subr.mxu0 0.0
    %1187 = vmatpush1.msra.mxu0 %v820
    %1188 = vmatprep.subr.mxu0 0.0
    %1189 = vmatpush1.msra.mxu0 %v819
    %1190 = vmatprep.subr.mxu0 0.0
    %1191 = vmatpush1.msra.mxu0 %v818
    %1192 = vmatprep.subr.mxu0 0.0
    %1193 = vmatpush1.msra.mxu0 %v817
    %1194 = vmatprep.subr.mxu0 0.0
    %1195 = vmatpush1.msra.mxu0 %v816
    %1196 = vmatprep.subr.mxu0 0.0
    %1197 = vmatpush2.msra.mxu0 0.0
    %1198 = vmatprep.subr.mxu0 0.0
    %1199 = vmatpush2.msra.mxu0 0.0
    %1200 = vmatprep.subr.mxu0 0.0
    %1201 = vmatpush2.msra.mxu0 0.0
    %1202 = vmatprep.subr.mxu0 0.0
    %1203 = vmatpush2.msra.mxu0 0.0
    %1204 = vmatprep.subr.mxu0 0.0
    %1205 = vmatpush2.msra.mxu0 0.0
    %1206 = vmatprep.subr.mxu0 0.0
    %1207 = vmatpush2.msra.mxu0 0.0
    %1208 = vmatprep.subr.mxu0 0.0
    %1209 = vmatpush2.msra.mxu0 0.0
    %1210 = vmatprep.subr.mxu0 0.0
    %1211 = vmatpush2.msra.mxu0 0.0
    %1212 = vmatprep.subr.mxu0 0.0
    %1213 = vmatpush2.msra.mxu0 0.0
    %1214 = vmatprep.subr.mxu0 0.0
    %1215 = vmatpush2.msra.mxu0 0.0
    %1216 = vmatprep.subr.mxu0 0.0
    %1217 = vmatpush2.msra.mxu0 0.0
    %1218 = vmatprep.subr.mxu0 0.0
    %1219 = vmatpush2.msra.mxu0 0.0
    %1220 = vmatprep.subr.mxu0 0.0
    %1221 = vmatpush2.msra.mxu0 0.0
    %1222 = vmatprep.subr.mxu0 0.0
    %1223 = vmatpush2.msra.mxu0 0.0
    %1224 = vmatprep.subr.mxu0 0.0
    %1225 = vmatpush2.msra.mxu0 0.0
    %1226 = vmatprep.subr.mxu0 0.0
    %1227 = vmatpush2.msra.mxu0 0.0
    %1228 = vmatprep.mubr.f32.mxu0 0.0
    %1229 = vmatmul.mubr.f32.gmra.mxu0 %v1162
    %v1230 = vpop.f32.mrf.mxu0
    %v1231 = vadd.f32 0.0, %v1230
    %v1232 = vpop.f32.mrf.mxu0
    %1233 = vdwg.mxu0
    %1235 = vrot.lane.b32.xlu0 %v1231, 64
    %v1236 = vpop.permute.xlu0 %1235
    %v1238 = vadd.f32 %v730, %v1236
    %v1239 = vtanh.pop %v1238
    %1241 = vrot.lane.b32.xlu0 %v1239, 64
    %v1242 = vpop.permute.xlu0 %1241
    %v1243 = vsel %vm911, %v1242, 0
    %1245 = vmatprep.subr.mxu0 0.0
    %1246 = vmatpush1.msra.mxu0 0.0
    %1247 = vmatprep.subr.mxu0 0.0
    %1248 = vmatpush1.msra.mxu0 0.0
    %1249 = vmatprep.subr.mxu0 0.0
    %1250 = vmatpush1.msra.mxu0 0.0
    %1251 = vmatprep.subr.mxu0 0.0
    %1252 = vmatpush1.msra.mxu0 0.0
    %1253 = vmatprep.subr.mxu0 0.0
    %1254 = vmatpush1.msra.mxu0 0.0
    %1255 = vmatprep.subr.mxu0 0.0
    %1256 = vmatpush1.msra.mxu0 0.0
    %1257 = vmatprep.subr.mxu0 0.0
    %1258 = vmatpush1.msra.mxu0 0.0
    %1259 = vmatprep.subr.mxu0 0.0
    %1260 = vmatpush1.msra.mxu0 0.0
    %1261 = vmatprep.subr.mxu0 0.0
    %1262 = vmatpush1.msra.mxu0 0.0
    %1263 = vmatprep.subr.mxu0 0.0
    %1264 = vmatpush1.msra.mxu0 0.0
    %1265 = vmatprep.subr.mxu0 0.0
    %1266 = vmatpush1.msra.mxu0 0.0
    %1267 = vmatprep.subr.mxu0 0.0
    %1268 = vmatpush1.msra.mxu0 0.0
    %1269 = vmatprep.subr.mxu0 0.0
    %1270 = vmatpush1.msra.mxu0 %v827
    %1271 = vmatprep.subr.mxu0 0.0
    %1272 = vmatpush1.msra.mxu0 %v826
    %1273 = vmatprep.subr.mxu0 0.0
    %1274 = vmatpush1.msra.mxu0 %v825
    %1275 = vmatprep.subr.mxu0 0.0
    %1276 = vmatpush1.msra.mxu0 %v824
    %1277 = vmatprep.subr.mxu0 0.0
    %1278 = vmatpush2.msra.mxu0 0.0
    %1279 = vmatprep.subr.mxu0 0.0
    %1280 = vmatpush2.msra.mxu0 0.0
    %1281 = vmatprep.subr.mxu0 0.0
    %1282 = vmatpush2.msra.mxu0 0.0
    %1283 = vmatprep.subr.mxu0 0.0
    %1284 = vmatpush2.msra.mxu0 0.0
    %1285 = vmatprep.subr.mxu0 0.0
    %1286 = vmatpush2.msra.mxu0 0.0
    %1287 = vmatprep.subr.mxu0 0.0
    %1288 = vmatpush2.msra.mxu0 0.0
    %1289 = vmatprep.subr.mxu0 0.0
    %1290 = vmatpush2.msra.mxu0 0.0
    %1291 = vmatprep.subr.mxu0 0.0
    %1292 = vmatpush2.msra.mxu0 0.0
    %1293 = vmatprep.subr.mxu0 0.0
    %1294 = vmatpush2.msra.mxu0 0.0
    %1295 = vmatprep.subr.mxu0 0.0
    %1296 = vmatpush2.msra.mxu0 0.0
    %1297 = vmatprep.subr.mxu0 0.0
    %1298 = vmatpush2.msra.mxu0 0.0
    %1299 = vmatprep.subr.mxu0 0.0
    %1300 = vmatpush2.msra.mxu0 0.0
    %1301 = vmatprep.subr.mxu0 0.0
    %1302 = vmatpush2.msra.mxu0 0.0
    %1303 = vmatprep.subr.mxu0 0.0
    %1304 = vmatpush2.msra.mxu0 0.0
    %1305 = vmatprep.subr.mxu0 0.0
    %1306 = vmatpush2.msra.mxu0 0.0
    %1307 = vmatprep.subr.mxu0 0.0
    %1308 = vmatpush2.msra.mxu0 0.0
    %1309 = vmatprep.mubr.f32.mxu0 0.0
    %1310 = vmatmul.mubr.f32.gmra.mxu0 %v1243
    %v1311 = vpop.f32.mrf.mxu0
    %v1312 = vadd.f32 %v909, %v1311
    %v1313 = vpop.f32.mrf.mxu0
    %1314 = vdwg.mxu0
    %1315 = vrot.lane.b32.xlu0 %v1231, 96
    %v1316 = vpop.permute.xlu0 %1315
    %v1318 = vadd.f32 %v1312, %v1316
    %v1319 = vtanh.pop %v1318
    %1322 = vrot.lane.b32.xlu0 %v1319, 32
    %v1323 = vpop.permute.xlu0 %1322
    %v1325 = vsel %vm911, %v1242, %v1323
    %v1327 = vsel %vm829, %v1325, 0
    %1329 = vmatprep.subr.mxu0 0.0
    %1330 = vmatpush1.msra.mxu0 0.0
    %1331 = vmatprep.subr.mxu0 0.0
    %1332 = vmatpush1.msra.mxu0 0.0
    %1333 = vmatprep.subr.mxu0 0.0
    %1334 = vmatpush1.msra.mxu0 0.0
    %1335 = vmatprep.subr.mxu0 0.0
    %1336 = vmatpush1.msra.mxu0 0.0
    %1337 = vmatprep.subr.mxu0 0.0
    %1338 = vmatpush1.msra.mxu0 0.0
    %1339 = vmatprep.subr.mxu0 0.0
    %1340 = vmatpush1.msra.mxu0 0.0
    %1341 = vmatprep.subr.mxu0 0.0
    %1342 = vmatpush1.msra.mxu0 0.0
    %1343 = vmatprep.subr.mxu0 0.0
    %1344 = vmatpush1.msra.mxu0 0.0
    %1345 = vmatprep.subr.mxu0 0.0
    %1346 = vmatpush1.msra.mxu0 %v823
    %1347 = vmatprep.subr.mxu0 0.0
    %1348 = vmatpush1.msra.mxu0 %v822
    %1349 = vmatprep.subr.mxu0 0.0
    %1350 = vmatpush1.msra.mxu0 %v821
    %1351 = vmatprep.subr.mxu0 0.0
    %1352 = vmatpush1.msra.mxu0 %v820
    %1353 = vmatprep.subr.mxu0 0.0
    %1354 = vmatpush1.msra.mxu0 %v819
    %1355 = vmatprep.subr.mxu0 0.0
    %1356 = vmatpush1.msra.mxu0 %v818
    %1357 = vmatprep.subr.mxu0 0.0
    %1358 = vmatpush1.msra.mxu0 %v817
    %1359 = vmatprep.subr.mxu0 0.0
    %1360 = vmatpush1.msra.mxu0 %v816
    %1361 = vmatprep.subr.mxu0 0.0
    %1362 = vmatpush2.msra.mxu0 0.0
    %1363 = vmatprep.subr.mxu0 0.0
    %1364 = vmatpush2.msra.mxu0 0.0
    %1365 = vmatprep.subr.mxu0 0.0
    %1366 = vmatpush2.msra.mxu0 0.0
    %1367 = vmatprep.subr.mxu0 0.0
    %1368 = vmatpush2.msra.mxu0 0.0
    %1369 = vmatprep.subr.mxu0 0.0
    %1370 = vmatpush2.msra.mxu0 0.0
    %1371 = vmatprep.subr.mxu0 0.0
    %1372 = vmatpush2.msra.mxu0 0.0
    %1373 = vmatprep.subr.mxu0 0.0
    %1374 = vmatpush2.msra.mxu0 0.0
    %1375 = vmatprep.subr.mxu0 0.0
    %1376 = vmatpush2.msra.mxu0 0.0
    %1377 = vmatprep.subr.mxu0 0.0
    %1378 = vmatpush2.msra.mxu0 0.0
    %1379 = vmatprep.subr.mxu0 0.0
    %1380 = vmatpush2.msra.mxu0 0.0
    %1381 = vmatprep.subr.mxu0 0.0
    %1382 = vmatpush2.msra.mxu0 0.0
    %1383 = vmatprep.subr.mxu0 0.0
    %1384 = vmatpush2.msra.mxu0 0.0
    %1385 = vmatprep.subr.mxu0 0.0
    %1386 = vmatpush2.msra.mxu0 0.0
    %1387 = vmatprep.subr.mxu0 0.0
    %1388 = vmatpush2.msra.mxu0 0.0
    %1389 = vmatprep.subr.mxu0 0.0
    %1390 = vmatpush2.msra.mxu0 0.0
    %1391 = vmatprep.subr.mxu0 0.0
    %1392 = vmatpush2.msra.mxu0 0.0
    %1393 = vmatprep.mubr.f32.mxu0 0.0
    %1394 = vmatmul.mubr.f32.gmra.mxu0 %v1327
    %v1395 = vpop.f32.mrf.mxu0
    %v1396 = vadd.f32 0.0, %v1395
    %v1397 = vpop.f32.mrf.mxu0
    %1398 = vdwg.mxu0
    %1400 = vrot.lane.b32.xlu0 %v1396, 96
    %v1401 = vpop.permute.xlu0 %1400
    %v1403 = vadd.f32 %v730, %v1401
    %v1404 = vtanh.pop %v1403
    %1406 = vrot.lane.b32.xlu0 %v1404, 32
    %v1407 = vpop.permute.xlu0 %1406
    %v1408 = vsel %vm911, %v1407, 0
    %1410 = vmatprep.subr.mxu0 0.0
    %1411 = vmatpush1.msra.mxu0 0.0
    %1412 = vmatprep.subr.mxu0 0.0
    %1413 = vmatpush1.msra.mxu0 0.0
    %1414 = vmatprep.subr.mxu0 0.0
    %1415 = vmatpush1.msra.mxu0 0.0
    %1416 = vmatprep.subr.mxu0 0.0
    %1417 = vmatpush1.msra.mxu0 0.0
    %1418 = vmatprep.subr.mxu0 0.0
    %1419 = vmatpush1.msra.mxu0 0.0
    %1420 = vmatprep.subr.mxu0 0.0
    %1421 = vmatpush1.msra.mxu0 0.0
    %1422 = vmatprep.subr.mxu0 0.0
    %1423 = vmatpush1.msra.mxu0 0.0
    %1424 = vmatprep.subr.mxu0 0.0
    %1425 = vmatpush1.msra.mxu0 0.0
    %1426 = vmatprep.subr.mxu0 0.0
    %1427 = vmatpush1.msra.mxu0 0.0
    %1428 = vmatprep.subr.mxu0 0.0
    %1429 = vmatpush1.msra.mxu0 0.0
    %1430 = vmatprep.subr.mxu0 0.0
    %1431 = vmatpush1.msra.mxu0 0.0
    %1432 = vmatprep.subr.mxu0 0.0
    %1433 = vmatpush1.msra.mxu0 0.0
    %1434 = vmatprep.subr.mxu0 0.0
    %1435 = vmatpush1.msra.mxu0 %v827
    %1436 = vmatprep.subr.mxu0 0.0
    %1437 = vmatpush1.msra.mxu0 %v826
    %1438 = vmatprep.subr.mxu0 0.0
    %1439 = vmatpush1.msra.mxu0 %v825
    %1440 = vmatprep.subr.mxu0 0.0
    %1441 = vmatpush1.msra.mxu0 %v824
    %1442 = vmatprep.subr.mxu0 0.0
    %1443 = vmatpush2.msra.mxu0 0.0
    %1444 = vmatprep.subr.mxu0 0.0
    %1445 = vmatpush2.msra.mxu0 0.0
    %1446 = vmatprep.subr.mxu0 0.0
    %1447 = vmatpush2.msra.mxu0 0.0
    %1448 = vmatprep.subr.mxu0 0.0
    %1449 = vmatpush2.msra.mxu0 0.0
    %1450 = vmatprep.subr.mxu0 0.0
    %1451 = vmatpush2.msra.mxu0 0.0
    %1452 = vmatprep.subr.mxu0 0.0
    %1453 = vmatpush2.msra.mxu0 0.0
    %1454 = vmatprep.subr.mxu0 0.0
    %1455 = vmatpush2.msra.mxu0 0.0
    %1456 = vmatprep.subr.mxu0 0.0
    %1457 = vmatpush2.msra.mxu0 0.0
    %1458 = vmatprep.subr.mxu0 0.0
    %1459 = vmatpush2.msra.mxu0 0.0
    %1460 = vmatprep.subr.mxu0 0.0
    %1461 = vmatpush2.msra.mxu0 0.0
    %1462 = vmatprep.subr.mxu0 0.0
    %1463 = vmatpush2.msra.mxu0 0.0
    %1464 = vmatprep.subr.mxu0 0.0
    %1465 = vmatpush2.msra.mxu0 0.0
    %1466 = vmatprep.subr.mxu0 0.0
    %1467 = vmatpush2.msra.mxu0 0.0
    %1468 = vmatprep.subr.mxu0 0.0
    %1469 = vmatpush2.msra.mxu0 0.0
    %1470 = vmatprep.subr.mxu0 0.0
    %1471 = vmatpush2.msra.mxu0 0.0
    %1472 = vmatprep.subr.mxu0 0.0
    %1473 = vmatpush2.msra.mxu0 0.0
    %1474 = vmatprep.mubr.f32.mxu0 0.0
    %1475 = vmatmul.mubr.f32.gmra.mxu0 %v1408
    %v1476 = vpop.f32.mrf.mxu0
    %v1477 = vadd.f32 %v909, %v1476
    %v1478 = vpop.f32.mrf.mxu0
    %1479 = vdwg.mxu0
    %v1480 = vadd.f32 %v1477, %v1401
    %v1481 = vtanh.pop %v1480
    %1484 = vrot.lane.b32.xlu0 %v1481, 32
    %v1485 = vpop.permute.xlu0 %1484
    %v1487 = vsel %vm911, %v1407, %v1485
    %v1489 = vsel %vm829, %v1487, 0
    %1491 = vmatprep.subr.mxu0 0.0
    %1492 = vmatpush1.msra.mxu0 0.0
    %1493 = vmatprep.subr.mxu0 0.0
    %1494 = vmatpush1.msra.mxu0 0.0
    %1495 = vmatprep.subr.mxu0 0.0
    %1496 = vmatpush1.msra.mxu0 0.0
    %1497 = vmatprep.subr.mxu0 0.0
    %1498 = vmatpush1.msra.mxu0 0.0
    %1499 = vmatprep.subr.mxu0 0.0
    %1500 = vmatpush1.msra.mxu0 0.0
    %1501 = vmatprep.subr.mxu0 0.0
    %1502 = vmatpush1.msra.mxu0 0.0
    %1503 = vmatprep.subr.mxu0 0.0
    %1504 = vmatpush1.msra.mxu0 0.0
    %1505 = vmatprep.subr.mxu0 0.0
    %1506 = vmatpush1.msra.mxu0 0.0
    %1507 = vmatprep.subr.mxu0 0.0
    %1508 = vmatpush1.msra.mxu0 %v823
    %1509 = vmatprep.subr.mxu0 0.0
    %1510 = vmatpush1.msra.mxu0 %v822
    %1511 = vmatprep.subr.mxu0 0.0
    %1512 = vmatpush1.msra.mxu0 %v821
    %1513 = vmatprep.subr.mxu0 0.0
    %1514 = vmatpush1.msra.mxu0 %v820
    %1515 = vmatprep.subr.mxu0 0.0
    %1516 = vmatpush1.msra.mxu0 %v819
    %1517 = vmatprep.subr.mxu0 0.0
    %1518 = vmatpush1.msra.mxu0 %v818
    %1519 = vmatprep.subr.mxu0 0.0
    %1520 = vmatpush1.msra.mxu0 %v817
    %1521 = vmatprep.subr.mxu0 0.0
    %1522 = vmatpush1.msra.mxu0 %v816
    %1523 = vmatprep.subr.mxu0 0.0
    %1524 = vmatpush2.msra.mxu0 0.0
    %1525 = vmatprep.subr.mxu0 0.0
    %1526 = vmatpush2.msra.mxu0 0.0
    %1527 = vmatprep.subr.mxu0 0.0
    %1528 = vmatpush2.msra.mxu0 0.0
    %1529 = vmatprep.subr.mxu0 0.0
    %1530 = vmatpush2.msra.mxu0 0.0
    %1531 = vmatprep.subr.mxu0 0.0
    %1532 = vmatpush2.msra.mxu0 0.0
    %1533 = vmatprep.subr.mxu0 0.0
    %1534 = vmatpush2.msra.mxu0 0.0
    %1535 = vmatprep.subr.mxu0 0.0
    %1536 = vmatpush2.msra.mxu0 0.0
    %1537 = vmatprep.subr.mxu0 0.0
    %1538 = vmatpush2.msra.mxu0 0.0
    %1539 = vmatprep.subr.mxu0 0.0
    %1540 = vmatpush2.msra.mxu0 0.0
    %1541 = vmatprep.subr.mxu0 0.0
    %1542 = vmatpush2.msra.mxu0 0.0
    %1543 = vmatprep.subr.mxu0 0.0
    %1544 = vmatpush2.msra.mxu0 0.0
    %1545 = vmatprep.subr.mxu0 0.0
    %1546 = vmatpush2.msra.mxu0 0.0
    %1547 = vmatprep.subr.mxu0 0.0
    %1548 = vmatpush2.msra.mxu0 0.0
    %1549 = vmatprep.subr.mxu0 0.0
    %1550 = vmatpush2.msra.mxu0 0.0
    %1551 = vmatprep.subr.mxu0 0.0
    %1552 = vmatpush2.msra.mxu0 0.0
    %1553 = vmatprep.subr.mxu0 0.0
    %1554 = vmatpush2.msra.mxu0 0.0
    %1555 = vmatprep.mubr.f32.mxu0 0.0
    %1556 = vmatmul.mubr.f32.gmra.mxu0 %v1489
    %v1557 = vpop.f32.mrf.mxu0
    %v1558 = vadd.f32 0.0, %v1557
    %v1559 = vpop.f32.mrf.mxu0
    %1560 = vdwg.mxu0
    %v1561 = vadd.f32 %v732, %v1558
    %v1562 = vtanh.pop %v1561
    %v1564 = vsel %vm911, %v1562, 0
    %1566 = vmatprep.subr.mxu0 0.0
    %1567 = vmatpush1.msra.mxu0 0.0
    %1568 = vmatprep.subr.mxu0 0.0
    %1569 = vmatpush1.msra.mxu0 0.0
    %1570 = vmatprep.subr.mxu0 0.0
    %1571 = vmatpush1.msra.mxu0 0.0
    %1572 = vmatprep.subr.mxu0 0.0
    %1573 = vmatpush1.msra.mxu0 0.0
    %1574 = vmatprep.subr.mxu0 0.0
    %1575 = vmatpush1.msra.mxu0 0.0
    %1576 = vmatprep.subr.mxu0 0.0
    %1577 = vmatpush1.msra.mxu0 0.0
    %1578 = vmatprep.subr.mxu0 0.0
    %1579 = vmatpush1.msra.mxu0 0.0
    %1580 = vmatprep.subr.mxu0 0.0
    %1581 = vmatpush1.msra.mxu0 0.0
    %1582 = vmatprep.subr.mxu0 0.0
    %1583 = vmatpush1.msra.mxu0 0.0
    %1584 = vmatprep.subr.mxu0 0.0
    %1585 = vmatpush1.msra.mxu0 0.0
    %1586 = vmatprep.subr.mxu0 0.0
    %1587 = vmatpush1.msra.mxu0 0.0
    %1588 = vmatprep.subr.mxu0 0.0
    %1589 = vmatpush1.msra.mxu0 0.0
    %1590 = vmatprep.subr.mxu0 0.0
    %1591 = vmatpush1.msra.mxu0 %v827
    %1592 = vmatprep.subr.mxu0 0.0
    %1593 = vmatpush1.msra.mxu0 %v826
    %1594 = vmatprep.subr.mxu0 0.0
    %1595 = vmatpush1.msra.mxu0 %v825
    %1596 = vmatprep.subr.mxu0 0.0
    %1597 = vmatpush1.msra.mxu0 %v824
    %1598 = vmatprep.subr.mxu0 0.0
    %1599 = vmatpush2.msra.mxu0 0.0
    %1600 = vmatprep.subr.mxu0 0.0
    %1601 = vmatpush2.msra.mxu0 0.0
    %1602 = vmatprep.subr.mxu0 0.0
    %1603 = vmatpush2.msra.mxu0 0.0
    %1604 = vmatprep.subr.mxu0 0.0
    %1605 = vmatpush2.msra.mxu0 0.0
    %1606 = vmatprep.subr.mxu0 0.0
    %1607 = vmatpush2.msra.mxu0 0.0
    %1608 = vmatprep.subr.mxu0 0.0
    %1609 = vmatpush2.msra.mxu0 0.0
    %1610 = vmatprep.subr.mxu0 0.0
    %1611 = vmatpush2.msra.mxu0 0.0
    %1612 = vmatprep.subr.mxu0 0.0
    %1613 = vmatpush2.msra.mxu0 0.0
    %1614 = vmatprep.subr.mxu0 0.0
    %1615 = vmatpush2.msra.mxu0 0.0
    %1616 = vmatprep.subr.mxu0 0.0
    %1617 = vmatpush2.msra.mxu0 0.0
    %1618 = vmatprep.subr.mxu0 0.0
    %1619 = vmatpush2.msra.mxu0 0.0
    %1620 = vmatprep.subr.mxu0 0.0
    %1621 = vmatpush2.msra.mxu0 0.0
    %1622 = vmatprep.subr.mxu0 0.0
    %1623 = vmatpush2.msra.mxu0 0.0
    %1624 = vmatprep.subr.mxu0 0.0
    %1625 = vmatpush2.msra.mxu0 0.0
    %1626 = vmatprep.subr.mxu0 0.0
    %1627 = vmatpush2.msra.mxu0 0.0
    %1628 = vmatprep.subr.mxu0 0.0
    %1629 = vmatpush2.msra.mxu0 0.0
    %1630 = vmatprep.mubr.f32.mxu0 0.0
    %1631 = vmatmul.mubr.f32.gmra.mxu0 %v1564
    %v1632 = vpop.f32.mrf.mxu0
    %v1633 = vadd.f32 %v909, %v1632
    %v1634 = vpop.f32.mrf.mxu0
    %1635 = vdwg.mxu0
    %1637 = vrot.lane.b32.xlu0 %v1558, 96
    %v1638 = vpop.permute.xlu0 %1637
    %v1640 = vadd.f32 %v1633, %v1638
    %v1641 = vtanh.pop %v1640
    %1643 = vrot.lane.b32.xlu0 %v1641, 32
    %v1644 = vpop.permute.xlu0 %1643
    %v1646 = vsel %vm911, %v1562, %v1644
    %v1648 = vsel %vm829, %v1646, 0
    %1650 = vmatprep.subr.mxu0 0.0
    %1651 = vmatpush1.msra.mxu0 0.0
    %1652 = vmatprep.subr.mxu0 0.0
    %1653 = vmatpush1.msra.mxu0 0.0
    %1654 = vmatprep.subr.mxu0 0.0
    %1655 = vmatpush1.msra.mxu0 0.0
    %1656 = vmatprep.subr.mxu0 0.0
    %1657 = vmatpush1.msra.mxu0 0.0
    %1658 = vmatprep.subr.mxu0 0.0
    %1659 = vmatpush1.msra.mxu0 0.0
    %1660 = vmatprep.subr.mxu0 0.0
    %1661 = vmatpush1.msra.mxu0 0.0
    %1662 = vmatprep.subr.mxu0 0.0
    %1663 = vmatpush1.msra.mxu0 0.0
    %1664 = vmatprep.subr.mxu0 0.0
    %1665 = vmatpush1.msra.mxu0 0.0
    %1666 = vmatprep.subr.mxu0 0.0
    %1667 = vmatpush1.msra.mxu0 %v823
    %1668 = vmatprep.subr.mxu0 0.0
    %1669 = vmatpush1.msra.mxu0 %v822
    %1670 = vmatprep.subr.mxu0 0.0
    %1671 = vmatpush1.msra.mxu0 %v821
    %1672 = vmatprep.subr.mxu0 0.0
    %1673 = vmatpush1.msra.mxu0 %v820
    %1674 = vmatprep.subr.mxu0 0.0
    %1675 = vmatpush1.msra.mxu0 %v819
    %1676 = vmatprep.subr.mxu0 0.0
    %1677 = vmatpush1.msra.mxu0 %v818
    %1678 = vmatprep.subr.mxu0 0.0
    %1679 = vmatpush1.msra.mxu0 %v817
    %1680 = vmatprep.subr.mxu0 0.0
    %1681 = vmatpush1.msra.mxu0 %v816
    %1682 = vmatprep.subr.mxu0 0.0
    %1683 = vmatpush2.msra.mxu0 0.0
    %1684 = vmatprep.subr.mxu0 0.0
    %1685 = vmatpush2.msra.mxu0 0.0
    %1686 = vmatprep.subr.mxu0 0.0
    %1687 = vmatpush2.msra.mxu0 0.0
    %1688 = vmatprep.subr.mxu0 0.0
    %1689 = vmatpush2.msra.mxu0 0.0
    %1690 = vmatprep.subr.mxu0 0.0
    %1691 = vmatpush2.msra.mxu0 0.0
    %1692 = vmatprep.subr.mxu0 0.0
    %1693 = vmatpush2.msra.mxu0 0.0
    %1694 = vmatprep.subr.mxu0 0.0
    %1695 = vmatpush2.msra.mxu0 0.0
    %1696 = vmatprep.subr.mxu0 0.0
    %1697 = vmatpush2.msra.mxu0 0.0
    %1698 = vmatprep.subr.mxu0 0.0
    %1699 = vmatpush2.msra.mxu0 0.0
    %1700 = vmatprep.subr.mxu0 0.0
    %1701 = vmatpush2.msra.mxu0 0.0
    %1702 = vmatprep.subr.mxu0 0.0
    %1703 = vmatpush2.msra.mxu0 0.0
    %1704 = vmatprep.subr.mxu0 0.0
    %1705 = vmatpush2.msra.mxu0 0.0
    %1706 = vmatprep.subr.mxu0 0.0
    %1707 = vmatpush2.msra.mxu0 0.0
    %1708 = vmatprep.subr.mxu0 0.0
    %1709 = vmatpush2.msra.mxu0 0.0
    %1710 = vmatprep.subr.mxu0 0.0
    %1711 = vmatpush2.msra.mxu0 0.0
    %1712 = vmatprep.subr.mxu0 0.0
    %1713 = vmatpush2.msra.mxu0 0.0
    %1714 = vmatprep.mubr.f32.mxu0 0.0
    %1715 = vmatmul.mubr.f32.gmra.mxu0 %v1648
    %v1716 = vpop.f32.mrf.mxu0
    %v1717 = vadd.f32 0.0, %v1716
    %v1718 = vpop.f32.mrf.mxu0
    %1719 = vdwg.mxu0
    %1721 = vrot.lane.b32.xlu0 %v1717, 32
    %v1722 = vpop.permute.xlu0 %1721
    %v1724 = vadd.f32 %v732, %v1722
    %v1725 = vtanh.pop %v1724
    %1727 = vrot.lane.b32.xlu0 %v1725, 96
    %v1728 = vpop.permute.xlu0 %1727
    %v1729 = vsel %vm911, %v1728, 0
    %1731 = vmatprep.subr.mxu0 0.0
    %1732 = vmatpush1.msra.mxu0 0.0
    %1733 = vmatprep.subr.mxu0 0.0
    %1734 = vmatpush1.msra.mxu0 0.0
    %1735 = vmatprep.subr.mxu0 0.0
    %1736 = vmatpush1.msra.mxu0 0.0
    %1737 = vmatprep.subr.mxu0 0.0
    %1738 = vmatpush1.msra.mxu0 0.0
    %1739 = vmatprep.subr.mxu0 0.0
    %1740 = vmatpush1.msra.mxu0 0.0
    %1741 = vmatprep.subr.mxu0 0.0
    %1742 = vmatpush1.msra.mxu0 0.0
    %1743 = vmatprep.subr.mxu0 0.0
    %1744 = vmatpush1.msra.mxu0 0.0
    %1745 = vmatprep.subr.mxu0 0.0
    %1746 = vmatpush1.msra.mxu0 0.0
    %1747 = vmatprep.subr.mxu0 0.0
    %1748 = vmatpush1.msra.mxu0 0.0
    %1749 = vmatprep.subr.mxu0 0.0
    %1750 = vmatpush1.msra.mxu0 0.0
    %1751 = vmatprep.subr.mxu0 0.0
    %1752 = vmatpush1.msra.mxu0 0.0
    %1753 = vmatprep.subr.mxu0 0.0
    %1754 = vmatpush1.msra.mxu0 0.0
    %1755 = vmatprep.subr.mxu0 0.0
    %1756 = vmatpush1.msra.mxu0 %v827
    %1757 = vmatprep.subr.mxu0 0.0
    %1758 = vmatpush1.msra.mxu0 %v826
    %1759 = vmatprep.subr.mxu0 0.0
    %1760 = vmatpush1.msra.mxu0 %v825
    %1761 = vmatprep.subr.mxu0 0.0
    %1762 = vmatpush1.msra.mxu0 %v824
    %1763 = vmatprep.subr.mxu0 0.0
    %1764 = vmatpush2.msra.mxu0 0.0
    %1765 = vmatprep.subr.mxu0 0.0
    %1766 = vmatpush2.msra.mxu0 0.0
    %1767 = vmatprep.subr.mxu0 0.0
    %1768 = vmatpush2.msra.mxu0 0.0
    %1769 = vmatprep.subr.mxu0 0.0
    %1770 = vmatpush2.msra.mxu0 0.0
    %1771 = vmatprep.subr.mxu0 0.0
    %1772 = vmatpush2.msra.mxu0 0.0
    %1773 = vmatprep.subr.mxu0 0.0
    %1774 = vmatpush2.msra.mxu0 0.0
    %1775 = vmatprep.subr.mxu0 0.0
    %1776 = vmatpush2.msra.mxu0 0.0
    %1777 = vmatprep.subr.mxu0 0.0
    %1778 = vmatpush2.msra.mxu0 0.0
    %1779 = vmatprep.subr.mxu0 0.0
    %1780 = vmatpush2.msra.mxu0 0.0
    %1781 = vmatprep.subr.mxu0 0.0
    %1782 = vmatpush2.msra.mxu0 0.0
    %1783 = vmatprep.subr.mxu0 0.0
    %1784 = vmatpush2.msra.mxu0 0.0
    %1785 = vmatprep.subr.mxu0 0.0
    %1786 = vmatpush2.msra.mxu0 0.0
    %1787 = vmatprep.subr.mxu0 0.0
    %1788 = vmatpush2.msra.mxu0 0.0
    %1789 = vmatprep.subr.mxu0 0.0
    %1790 = vmatpush2.msra.mxu0 0.0
    %1791 = vmatprep.subr.mxu0 0.0
    %1792 = vmatpush2.msra.mxu0 0.0
    %1793 = vmatprep.subr.mxu0 0.0
    %1794 = vmatpush2.msra.mxu0 0.0
    %1795 = vmatprep.mubr.f32.mxu0 0.0
    %1796 = vmatmul.mubr.f32.gmra.mxu0 %v1729
    %v1797 = vpop.f32.mrf.mxu0
    %v1798 = vadd.f32 %v909, %v1797
    %v1799 = vpop.f32.mrf.mxu0
    %1800 = vdwg.mxu0
    %1801 = vrot.lane.b32.xlu0 %v1717, 96
    %v1802 = vpop.permute.xlu0 %1801
    %v1804 = vadd.f32 %v1798, %v1802
    %v1805 = vtanh.pop %v1804
    %1808 = vrot.lane.b32.xlu0 %v1805, 32
    %v1809 = vpop.permute.xlu0 %1808
    %v1811 = vsel %vm911, %v1728, %v1809
    %v1813 = vsel %vm829, %v1811, 0
    %1815 = vmatprep.subr.mxu0 0.0
    %1816 = vmatpush1.msra.mxu0 0.0
    %1817 = vmatprep.subr.mxu0 0.0
    %1818 = vmatpush1.msra.mxu0 0.0
    %1819 = vmatprep.subr.mxu0 0.0
    %1820 = vmatpush1.msra.mxu0 0.0
    %1821 = vmatprep.subr.mxu0 0.0
    %1822 = vmatpush1.msra.mxu0 0.0
    %1823 = vmatprep.subr.mxu0 0.0
    %1824 = vmatpush1.msra.mxu0 0.0
    %1825 = vmatprep.subr.mxu0 0.0
    %1826 = vmatpush1.msra.mxu0 0.0
    %1827 = vmatprep.subr.mxu0 0.0
    %1828 = vmatpush1.msra.mxu0 0.0
    %1829 = vmatprep.subr.mxu0 0.0
    %1830 = vmatpush1.msra.mxu0 0.0
    %1831 = vmatprep.subr.mxu0 0.0
    %1832 = vmatpush1.msra.mxu0 %v823
    %1833 = vmatprep.subr.mxu0 0.0
    %1834 = vmatpush1.msra.mxu0 %v822
    %1835 = vmatprep.subr.mxu0 0.0
    %1836 = vmatpush1.msra.mxu0 %v821
    %1837 = vmatprep.subr.mxu0 0.0
    %1838 = vmatpush1.msra.mxu0 %v820
    %1839 = vmatprep.subr.mxu0 0.0
    %1840 = vmatpush1.msra.mxu0 %v819
    %1841 = vmatprep.subr.mxu0 0.0
    %1842 = vmatpush1.msra.mxu0 %v818
    %1843 = vmatprep.subr.mxu0 0.0
    %1844 = vmatpush1.msra.mxu0 %v817
    %1845 = vmatprep.subr.mxu0 0.0
    %1846 = vmatpush1.msra.mxu0 %v816
    %1847 = vmatprep.subr.mxu0 0.0
    %1848 = vmatpush2.msra.mxu0 0.0
    %1849 = vmatprep.subr.mxu0 0.0
    %1850 = vmatpush2.msra.mxu0 0.0
    %1851 = vmatprep.subr.mxu0 0.0
    %1852 = vmatpush2.msra.mxu0 0.0
    %1853 = vmatprep.subr.mxu0 0.0
    %1854 = vmatpush2.msra.mxu0 0.0
    %1855 = vmatprep.subr.mxu0 0.0
    %1856 = vmatpush2.msra.mxu0 0.0
    %1857 = vmatprep.subr.mxu0 0.0
    %1858 = vmatpush2.msra.mxu0 0.0
    %1859 = vmatprep.subr.mxu0 0.0
    %1860 = vmatpush2.msra.mxu0 0.0
    %1861 = vmatprep.subr.mxu0 0.0
    %1862 = vmatpush2.msra.mxu0 0.0
    %1863 = vmatprep.subr.mxu0 0.0
    %1864 = vmatpush2.msra.mxu0 0.0
    %1865 = vmatprep.subr.mxu0 0.0
    %1866 = vmatpush2.msra.mxu0 0.0
    %1867 = vmatprep.subr.mxu0 0.0
    %1868 = vmatpush2.msra.mxu0 0.0
    %1869 = vmatprep.subr.mxu0 0.0
    %1870 = vmatpush2.msra.mxu0 0.0
    %1871 = vmatprep.subr.mxu0 0.0
    %1872 = vmatpush2.msra.mxu0 0.0
    %1873 = vmatprep.subr.mxu0 0.0
    %1874 = vmatpush2.msra.mxu0 0.0
    %1875 = vmatprep.subr.mxu0 0.0
    %1876 = vmatpush2.msra.mxu0 0.0
    %1877 = vmatprep.subr.mxu0 0.0
    %1878 = vmatpush2.msra.mxu0 0.0
    %1879 = vmatprep.mubr.f32.mxu0 0.0
    %1880 = vmatmul.mubr.f32.gmra.mxu0 %v1813
    %v1881 = vpop.f32.mrf.mxu0
    %v1882 = vadd.f32 0.0, %v1881
    %v1883 = vpop.f32.mrf.mxu0
    %1884 = vdwg.mxu0
    %1886 = vrot.lane.b32.xlu0 %v1882, 64
    %v1887 = vpop.permute.xlu0 %1886
    %v1889 = vadd.f32 %v732, %v1887
    %v1890 = vtanh.pop %v1889
    %1892 = vrot.lane.b32.xlu0 %v1890, 64
    %v1893 = vpop.permute.xlu0 %1892
    %v1894 = vsel %vm911, %v1893, 0
    %1896 = vmatprep.subr.mxu0 0.0
    %1897 = vmatpush1.msra.mxu0 0.0
    %1898 = vmatprep.subr.mxu0 0.0
    %1899 = vmatpush1.msra.mxu0 0.0
    %1900 = vmatprep.subr.mxu0 0.0
    %1901 = vmatpush1.msra.mxu0 0.0
    %1902 = vmatprep.subr.mxu0 0.0
    %1903 = vmatpush1.msra.mxu0 0.0
    %1904 = vmatprep.subr.mxu0 0.0
    %1905 = vmatpush1.msra.mxu0 0.0
    %1906 = vmatprep.subr.mxu0 0.0
    %1907 = vmatpush1.msra.mxu0 0.0
    %1908 = vmatprep.subr.mxu0 0.0
    %1909 = vmatpush1.msra.mxu0 0.0
    %1910 = vmatprep.subr.mxu0 0.0
    %1911 = vmatpush1.msra.mxu0 0.0
    %1912 = vmatprep.subr.mxu0 0.0
    %1913 = vmatpush1.msra.mxu0 0.0
    %1914 = vmatprep.subr.mxu0 0.0
    %1915 = vmatpush1.msra.mxu0 0.0
    %1916 = vmatprep.subr.mxu0 0.0
    %1917 = vmatpush1.msra.mxu0 0.0
    %1918 = vmatprep.subr.mxu0 0.0
    %1919 = vmatpush1.msra.mxu0 0.0
    %1920 = vmatprep.subr.mxu0 0.0
    %1921 = vmatpush1.msra.mxu0 %v827
    %1922 = vmatprep.subr.mxu0 0.0
    %1923 = vmatpush1.msra.mxu0 %v826
    %1924 = vmatprep.subr.mxu0 0.0
    %1925 = vmatpush1.msra.mxu0 %v825
    %1926 = vmatprep.subr.mxu0 0.0
    %1927 = vmatpush1.msra.mxu0 %v824
    %1928 = vmatprep.subr.mxu0 0.0
    %1929 = vmatpush2.msra.mxu0 0.0
    %1930 = vmatprep.subr.mxu0 0.0
    %1931 = vmatpush2.msra.mxu0 0.0
    %1932 = vmatprep.subr.mxu0 0.0
    %1933 = vmatpush2.msra.mxu0 0.0
    %1934 = vmatprep.subr.mxu0 0.0
    %1935 = vmatpush2.msra.mxu0 0.0
    %1936 = vmatprep.subr.mxu0 0.0
    %1937 = vmatpush2.msra.mxu0 0.0
    %1938 = vmatprep.subr.mxu0 0.0
    %1939 = vmatpush2.msra.mxu0 0.0
    %1940 = vmatprep.subr.mxu0 0.0
    %1941 = vmatpush2.msra.mxu0 0.0
    %1942 = vmatprep.subr.mxu0 0.0
    %1943 = vmatpush2.msra.mxu0 0.0
    %1944 = vmatprep.subr.mxu0 0.0
    %1945 = vmatpush2.msra.mxu0 0.0
    %1946 = vmatprep.subr.mxu0 0.0
    %1947 = vmatpush2.msra.mxu0 0.0
    %1948 = vmatprep.subr.mxu0 0.0
    %1949 = vmatpush2.msra.mxu0 0.0
    %1950 = vmatprep.subr.mxu0 0.0
    %1951 = vmatpush2.msra.mxu0 0.0
    %1952 = vmatprep.subr.mxu0 0.0
    %1953 = vmatpush2.msra.mxu0 0.0
    %1954 = vmatprep.subr.mxu0 0.0
    %1955 = vmatpush2.msra.mxu0 0.0
    %1956 = vmatprep.subr.mxu0 0.0
    %1957 = vmatpush2.msra.mxu0 0.0
    %1958 = vmatprep.subr.mxu0 0.0
    %1959 = vmatpush2.msra.mxu0 0.0
    %1960 = vmatprep.mubr.f32.mxu0 0.0
    %1961 = vmatmul.mubr.f32.gmra.mxu0 %v1894
    %v1962 = vpop.f32.mrf.mxu0
    %v1963 = vadd.f32 %v909, %v1962
    %v1964 = vpop.f32.mrf.mxu0
    %1965 = vdwg.mxu0
    %1966 = vrot.lane.b32.xlu0 %v1882, 96
    %v1967 = vpop.permute.xlu0 %1966
    %v1969 = vadd.f32 %v1963, %v1967
    %v1970 = vtanh.pop %v1969
    %1973 = vrot.lane.b32.xlu0 %v1970, 32
    %v1974 = vpop.permute.xlu0 %1973
    %v1976 = vsel %vm911, %v1893, %v1974
    %v1978 = vsel %vm829, %v1976, 0
    %1980 = vmatprep.subr.mxu0 0.0
    %1981 = vmatpush1.msra.mxu0 0.0
    %1982 = vmatprep.subr.mxu0 0.0
    %1983 = vmatpush1.msra.mxu0 0.0
    %1984 = vmatprep.subr.mxu0 0.0
    %1985 = vmatpush1.msra.mxu0 0.0
    %1986 = vmatprep.subr.mxu0 0.0
    %1987 = vmatpush1.msra.mxu0 0.0
    %1988 = vmatprep.subr.mxu0 0.0
    %1989 = vmatpush1.msra.mxu0 0.0
    %1990 = vmatprep.subr.mxu0 0.0
    %1991 = vmatpush1.msra.mxu0 0.0
    %1992 = vmatprep.subr.mxu0 0.0
    %1993 = vmatpush1.msra.mxu0 0.0
    %1994 = vmatprep.subr.mxu0 0.0
    %1995 = vmatpush1.msra.mxu0 0.0
    %1996 = vmatprep.subr.mxu0 0.0
    %1997 = vmatpush1.msra.mxu0 %v823
    %1998 = vmatprep.subr.mxu0 0.0
    %1999 = vmatpush1.msra.mxu0 %v822
    %2000 = vmatprep.subr.mxu0 0.0
    %2001 = vmatpush1.msra.mxu0 %v821
    %2002 = vmatprep.subr.mxu0 0.0
    %2003 = vmatpush1.msra.mxu0 %v820
    %2004 = vmatprep.subr.mxu0 0.0
    %2005 = vmatpush1.msra.mxu0 %v819
    %2006 = vmatprep.subr.mxu0 0.0
    %2007 = vmatpush1.msra.mxu0 %v818
    %2008 = vmatprep.subr.mxu0 0.0
    %2009 = vmatpush1.msra.mxu0 %v817
    %2010 = vmatprep.subr.mxu0 0.0
    %2011 = vmatpush1.msra.mxu0 %v816
    %2012 = vmatprep.subr.mxu0 0.0
    %2013 = vmatpush2.msra.mxu0 0.0
    %2014 = vmatprep.subr.mxu0 0.0
    %2015 = vmatpush2.msra.mxu0 0.0
    %2016 = vmatprep.subr.mxu0 0.0
    %2017 = vmatpush2.msra.mxu0 0.0
    %2018 = vmatprep.subr.mxu0 0.0
    %2019 = vmatpush2.msra.mxu0 0.0
    %2020 = vmatprep.subr.mxu0 0.0
    %2021 = vmatpush2.msra.mxu0 0.0
    %2022 = vmatprep.subr.mxu0 0.0
    %2023 = vmatpush2.msra.mxu0 0.0
    %2024 = vmatprep.subr.mxu0 0.0
    %2025 = vmatpush2.msra.mxu0 0.0
    %2026 = vmatprep.subr.mxu0 0.0
    %2027 = vmatpush2.msra.mxu0 0.0
    %2028 = vmatprep.subr.mxu0 0.0
    %2029 = vmatpush2.msra.mxu0 0.0
    %2030 = vmatprep.subr.mxu0 0.0
    %2031 = vmatpush2.msra.mxu0 0.0
    %2032 = vmatprep.subr.mxu0 0.0
    %2033 = vmatpush2.msra.mxu0 0.0
    %2034 = vmatprep.subr.mxu0 0.0
    %2035 = vmatpush2.msra.mxu0 0.0
    %2036 = vmatprep.subr.mxu0 0.0
    %2037 = vmatpush2.msra.mxu0 0.0
    %2038 = vmatprep.subr.mxu0 0.0
    %2039 = vmatpush2.msra.mxu0 0.0
    %2040 = vmatprep.subr.mxu0 0.0
    %2041 = vmatpush2.msra.mxu0 0.0
    %2042 = vmatprep.subr.mxu0 0.0
    %2043 = vmatpush2.msra.mxu0 0.0
    %2044 = vmatprep.mubr.f32.mxu0 0.0
    %2045 = vmatmul.mubr.f32.gmra.mxu0 %v1978
    %v2046 = vpop.f32.mrf.mxu0
    %v2047 = vadd.f32 0.0, %v2046
    %v2048 = vpop.f32.mrf.mxu0
    %2049 = vdwg.mxu0
    %2051 = vrot.lane.b32.xlu0 %v2047, 96
    %v2052 = vpop.permute.xlu0 %2051
    %v2054 = vadd.f32 %v732, %v2052
    %v2055 = vtanh.pop %v2054
    %2057 = vrot.lane.b32.xlu0 %v2055, 32
    %v2058 = vpop.permute.xlu0 %2057
    %v2059 = vsel %vm911, %v2058, 0
    %2061 = vmatprep.subr.mxu0 0.0
    %2062 = vmatpush1.msra.mxu0 0.0
    %2063 = vmatprep.subr.mxu0 0.0
    %2064 = vmatpush1.msra.mxu0 0.0
    %2065 = vmatprep.subr.mxu0 0.0
    %2066 = vmatpush1.msra.mxu0 0.0
    %2067 = vmatprep.subr.mxu0 0.0
    %2068 = vmatpush1.msra.mxu0 0.0
    %2069 = vmatprep.subr.mxu0 0.0
    %2070 = vmatpush1.msra.mxu0 0.0
    %2071 = vmatprep.subr.mxu0 0.0
    %2072 = vmatpush1.msra.mxu0 0.0
    %2073 = vmatprep.subr.mxu0 0.0
    %2074 = vmatpush1.msra.mxu0 0.0
    %2075 = vmatprep.subr.mxu0 0.0
    %2076 = vmatpush1.msra.mxu0 0.0
    %2077 = vmatprep.subr.mxu0 0.0
    %2078 = vmatpush1.msra.mxu0 0.0
    %2079 = vmatprep.subr.mxu0 0.0
    %2080 = vmatpush1.msra.mxu0 0.0
    %2081 = vmatprep.subr.mxu0 0.0
    %2082 = vmatpush1.msra.mxu0 0.0
    %2083 = vmatprep.subr.mxu0 0.0
    %2084 = vmatpush1.msra.mxu0 0.0
    %2085 = vmatprep.subr.mxu0 0.0
    %2086 = vmatpush1.msra.mxu0 %v827
    %2087 = vmatprep.subr.mxu0 0.0
    %2088 = vmatpush1.msra.mxu0 %v826
    %2089 = vmatprep.subr.mxu0 0.0
    %2090 = vmatpush1.msra.mxu0 %v825
    %2091 = vmatprep.subr.mxu0 0.0
    %2092 = vmatpush1.msra.mxu0 %v824
    %2093 = vmatprep.subr.mxu0 0.0
    %2094 = vmatpush2.msra.mxu0 0.0
    %2095 = vmatprep.subr.mxu0 0.0
    %2096 = vmatpush2.msra.mxu0 0.0
    %2097 = vmatprep.subr.mxu0 0.0
    %2098 = vmatpush2.msra.mxu0 0.0
    %2099 = vmatprep.subr.mxu0 0.0
    %2100 = vmatpush2.msra.mxu0 0.0
    %2101 = vmatprep.subr.mxu0 0.0
    %2102 = vmatpush2.msra.mxu0 0.0
    %2103 = vmatprep.subr.mxu0 0.0
    %2104 = vmatpush2.msra.mxu0 0.0
    %2105 = vmatprep.subr.mxu0 0.0
    %2106 = vmatpush2.msra.mxu0 0.0
    %2107 = vmatprep.subr.mxu0 0.0
    %2108 = vmatpush2.msra.mxu0 0.0
    %2109 = vmatprep.subr.mxu0 0.0
    %2110 = vmatpush2.msra.mxu0 0.0
    %2111 = vmatprep.subr.mxu0 0.0
    %2112 = vmatpush2.msra.mxu0 0.0
    %2113 = vmatprep.subr.mxu0 0.0
    %2114 = vmatpush2.msra.mxu0 0.0
    %2115 = vmatprep.subr.mxu0 0.0
    %2116 = vmatpush2.msra.mxu0 0.0
    %2117 = vmatprep.subr.mxu0 0.0
    %2118 = vmatpush2.msra.mxu0 0.0
    %2119 = vmatprep.subr.mxu0 0.0
    %2120 = vmatpush2.msra.mxu0 0.0
    %2121 = vmatprep.subr.mxu0 0.0
    %2122 = vmatpush2.msra.mxu0 0.0
    %2123 = vmatprep.subr.mxu0 0.0
    %2124 = vmatpush2.msra.mxu0 0.0
    %2125 = vmatprep.mubr.f32.mxu0 0.0
    %2126 = vmatmul.mubr.f32.gmra.mxu0 %v2059
    %v2127 = vpop.f32.mrf.mxu0
    %v2128 = vadd.f32 %v909, %v2127
    %v2129 = vpop.f32.mrf.mxu0
    %2130 = vdwg.mxu0
    %v2131 = vadd.f32 %v2128, %v2052
    %v2132 = vtanh.pop %v2131
    %2135 = vrot.lane.b32.xlu0 %v2132, 32
    %v2136 = vpop.permute.xlu0 %2135
    %v2138 = vsel %vm911, %v2058, %v2136
    %v2140 = vsel %vm829, %v2138, 0
    %2142 = vmatprep.subr.mxu0 0.0
    %2143 = vmatpush1.msra.mxu0 0.0
    %2144 = vmatprep.subr.mxu0 0.0
    %2145 = vmatpush1.msra.mxu0 0.0
    %2146 = vmatprep.subr.mxu0 0.0
    %2147 = vmatpush1.msra.mxu0 0.0
    %2148 = vmatprep.subr.mxu0 0.0
    %2149 = vmatpush1.msra.mxu0 0.0
    %2150 = vmatprep.subr.mxu0 0.0
    %2151 = vmatpush1.msra.mxu0 0.0
    %2152 = vmatprep.subr.mxu0 0.0
    %2153 = vmatpush1.msra.mxu0 0.0
    %2154 = vmatprep.subr.mxu0 0.0
    %2155 = vmatpush1.msra.mxu0 0.0
    %2156 = vmatprep.subr.mxu0 0.0
    %2157 = vmatpush1.msra.mxu0 0.0
    %2158 = vmatprep.subr.mxu0 0.0
    %2159 = vmatpush1.msra.mxu0 %v823
    %2160 = vmatprep.subr.mxu0 0.0
    %2161 = vmatpush1.msra.mxu0 %v822
    %2162 = vmatprep.subr.mxu0 0.0
    %2163 = vmatpush1.msra.mxu0 %v821
    %2164 = vmatprep.subr.mxu0 0.0
    %2165 = vmatpush1.msra.mxu0 %v820
    %2166 = vmatprep.subr.mxu0 0.0
    %2167 = vmatpush1.msra.mxu0 %v819
    %2168 = vmatprep.subr.mxu0 0.0
    %2169 = vmatpush1.msra.mxu0 %v818
    %2170 = vmatprep.subr.mxu0 0.0
    %2171 = vmatpush1.msra.mxu0 %v817
    %2172 = vmatprep.subr.mxu0 0.0
    %2173 = vmatpush1.msra.mxu0 %v816
    %2174 = vmatprep.subr.mxu0 0.0
    %2175 = vmatpush2.msra.mxu0 0.0
    %2176 = vmatprep.subr.mxu0 0.0
    %2177 = vmatpush2.msra.mxu0 0.0
    %2178 = vmatprep.subr.mxu0 0.0
    %2179 = vmatpush2.msra.mxu0 0.0
    %2180 = vmatprep.subr.mxu0 0.0
    %2181 = vmatpush2.msra.mxu0 0.0
    %2182 = vmatprep.subr.mxu0 0.0
    %2183 = vmatpush2.msra.mxu0 0.0
    %2184 = vmatprep.subr.mxu0 0.0
    %2185 = vmatpush2.msra.mxu0 0.0
    %2186 = vmatprep.subr.mxu0 0.0
    %2187 = vmatpush2.msra.mxu0 0.0
    %2188 = vmatprep.subr.mxu0 0.0
    %2189 = vmatpush2.msra.mxu0 0.0
    %2190 = vmatprep.subr.mxu0 0.0
    %2191 = vmatpush2.msra.mxu0 0.0
    %2192 = vmatprep.subr.mxu0 0.0
    %2193 = vmatpush2.msra.mxu0 0.0
    %2194 = vmatprep.subr.mxu0 0.0
    %2195 = vmatpush2.msra.mxu0 0.0
    %2196 = vmatprep.subr.mxu0 0.0
    %2197 = vmatpush2.msra.mxu0 0.0
    %2198 = vmatprep.subr.mxu0 0.0
    %2199 = vmatpush2.msra.mxu0 0.0
    %2200 = vmatprep.subr.mxu0 0.0
    %2201 = vmatpush2.msra.mxu0 0.0
    %2202 = vmatprep.subr.mxu0 0.0
    %2203 = vmatpush2.msra.mxu0 0.0
    %2204 = vmatprep.subr.mxu0 0.0
    %2205 = vmatpush2.msra.mxu0 0.0
    %2206 = vmatprep.mubr.f32.mxu0 0.0
    %2207 = vmatmul.mubr.f32.gmra.mxu0 %v2140
    %v2208 = vpop.f32.mrf.mxu0
    %v2209 = vadd.f32 0.0, %v2208
    %v2210 = vpop.f32.mrf.mxu0
    %2211 = vdwg.mxu0
    %v2212 = vadd.f32 %v811, %v2209
    %v2213 = vtanh.pop %v2212
    %v2215 = vsel %vm911, %v2213, 0
    %2217 = vmatprep.subr.mxu0 0.0
    %2218 = vmatpush1.msra.mxu0 0.0
    %2219 = vmatprep.subr.mxu0 0.0
    %2220 = vmatpush1.msra.mxu0 0.0
    %2221 = vmatprep.subr.mxu0 0.0
    %2222 = vmatpush1.msra.mxu0 0.0
    %2223 = vmatprep.subr.mxu0 0.0
    %2224 = vmatpush1.msra.mxu0 0.0
    %2225 = vmatprep.subr.mxu0 0.0
    %2226 = vmatpush1.msra.mxu0 0.0
    %2227 = vmatprep.subr.mxu0 0.0
    %2228 = vmatpush1.msra.mxu0 0.0
    %2229 = vmatprep.subr.mxu0 0.0
    %2230 = vmatpush1.msra.mxu0 0.0
    %2231 = vmatprep.subr.mxu0 0.0
    %2232 = vmatpush1.msra.mxu0 0.0
    %2233 = vmatprep.subr.mxu0 0.0
    %2234 = vmatpush1.msra.mxu0 0.0
    %2235 = vmatprep.subr.mxu0 0.0
    %2236 = vmatpush1.msra.mxu0 0.0
    %2237 = vmatprep.subr.mxu0 0.0
    %2238 = vmatpush1.msra.mxu0 0.0
    %2239 = vmatprep.subr.mxu0 0.0
    %2240 = vmatpush1.msra.mxu0 0.0
    %2241 = vmatprep.subr.mxu0 0.0
    %2242 = vmatpush1.msra.mxu0 %v827
    %2243 = vmatprep.subr.mxu0 0.0
    %2244 = vmatpush1.msra.mxu0 %v826
    %2245 = vmatprep.subr.mxu0 0.0
    %2246 = vmatpush1.msra.mxu0 %v825
    %2247 = vmatprep.subr.mxu0 0.0
    %2248 = vmatpush1.msra.mxu0 %v824
    %2249 = vmatprep.subr.mxu0 0.0
    %2250 = vmatpush2.msra.mxu0 0.0
    %2251 = vmatprep.subr.mxu0 0.0
    %2252 = vmatpush2.msra.mxu0 0.0
    %2253 = vmatprep.subr.mxu0 0.0
    %2254 = vmatpush2.msra.mxu0 0.0
    %2255 = vmatprep.subr.mxu0 0.0
    %2256 = vmatpush2.msra.mxu0 0.0
    %2257 = vmatprep.subr.mxu0 0.0
    %2258 = vmatpush2.msra.mxu0 0.0
    %2259 = vmatprep.subr.mxu0 0.0
    %2260 = vmatpush2.msra.mxu0 0.0
    %2261 = vmatprep.subr.mxu0 0.0
    %2262 = vmatpush2.msra.mxu0 0.0
    %2263 = vmatprep.subr.mxu0 0.0
    %2264 = vmatpush2.msra.mxu0 0.0
    %2265 = vmatprep.subr.mxu0 0.0
    %2266 = vmatpush2.msra.mxu0 0.0
    %2267 = vmatprep.subr.mxu0 0.0
    %2268 = vmatpush2.msra.mxu0 0.0
    %2269 = vmatprep.subr.mxu0 0.0
    %2270 = vmatpush2.msra.mxu0 0.0
    %2271 = vmatprep.subr.mxu0 0.0
    %2272 = vmatpush2.msra.mxu0 0.0
    %2273 = vmatprep.subr.mxu0 0.0
    %2274 = vmatpush2.msra.mxu0 0.0
    %2275 = vmatprep.subr.mxu0 0.0
    %2276 = vmatpush2.msra.mxu0 0.0
    %2277 = vmatprep.subr.mxu0 0.0
    %2278 = vmatpush2.msra.mxu0 0.0
    %2279 = vmatprep.subr.mxu0 0.0
    %2280 = vmatpush2.msra.mxu0 0.0
    %2281 = vmatprep.mubr.f32.mxu0 0.0
    %2282 = vmatmul.mubr.f32.gmra.mxu0 %v2215
    %v2283 = vpop.f32.mrf.mxu0
    %v2284 = vadd.f32 %v909, %v2283
    %v2285 = vpop.f32.mrf.mxu0
    %2286 = vdwg.mxu0
    %2288 = vrot.lane.b32.xlu0 %v2209, 96
    %v2289 = vpop.permute.xlu0 %2288
    %v2291 = vadd.f32 %v2284, %v2289
    %v2292 = vtanh.pop %v2291
    %2294 = vrot.lane.b32.xlu0 %v2292, 32
    %v2295 = vpop.permute.xlu0 %2294
    %v2297 = vsel %vm911, %v2213, %v2295
    %v2299 = vsel %vm829, %v2297, 0
    %2301 = vmatprep.subr.mxu0 0.0
    %2302 = vmatpush1.msra.mxu0 0.0
    %2303 = vmatprep.subr.mxu0 0.0
    %2304 = vmatpush1.msra.mxu0 0.0
    %2305 = vmatprep.subr.mxu0 0.0
    %2306 = vmatpush1.msra.mxu0 0.0
    %2307 = vmatprep.subr.mxu0 0.0
    %2308 = vmatpush1.msra.mxu0 0.0
    %2309 = vmatprep.subr.mxu0 0.0
    %2310 = vmatpush1.msra.mxu0 0.0
    %2311 = vmatprep.subr.mxu0 0.0
    %2312 = vmatpush1.msra.mxu0 0.0
    %2313 = vmatprep.subr.mxu0 0.0
    %2314 = vmatpush1.msra.mxu0 0.0
    %2315 = vmatprep.subr.mxu0 0.0
    %2316 = vmatpush1.msra.mxu0 0.0
    %2317 = vmatprep.subr.mxu0 0.0
    %2318 = vmatpush1.msra.mxu0 %v823
    %2319 = vmatprep.subr.mxu0 0.0
    %2320 = vmatpush1.msra.mxu0 %v822
    %2321 = vmatprep.subr.mxu0 0.0
    %2322 = vmatpush1.msra.mxu0 %v821
    %2323 = vmatprep.subr.mxu0 0.0
    %2324 = vmatpush1.msra.mxu0 %v820
    %2325 = vmatprep.subr.mxu0 0.0
    %2326 = vmatpush1.msra.mxu0 %v819
    %2327 = vmatprep.subr.mxu0 0.0
    %2328 = vmatpush1.msra.mxu0 %v818
    %2329 = vmatprep.subr.mxu0 0.0
    %2330 = vmatpush1.msra.mxu0 %v817
    %2331 = vmatprep.subr.mxu0 0.0
    %2332 = vmatpush1.msra.mxu0 %v816
    %2333 = vmatprep.subr.mxu0 0.0
    %2334 = vmatpush2.msra.mxu0 0.0
    %2335 = vmatprep.subr.mxu0 0.0
    %2336 = vmatpush2.msra.mxu0 0.0
    %2337 = vmatprep.subr.mxu0 0.0
    %2338 = vmatpush2.msra.mxu0 0.0
    %2339 = vmatprep.subr.mxu0 0.0
    %2340 = vmatpush2.msra.mxu0 0.0
    %2341 = vmatprep.subr.mxu0 0.0
    %2342 = vmatpush2.msra.mxu0 0.0
    %2343 = vmatprep.subr.mxu0 0.0
    %2344 = vmatpush2.msra.mxu0 0.0
    %2345 = vmatprep.subr.mxu0 0.0
    %2346 = vmatpush2.msra.mxu0 0.0
    %2347 = vmatprep.subr.mxu0 0.0
    %2348 = vmatpush2.msra.mxu0 0.0
    %2349 = vmatprep.subr.mxu0 0.0
    %2350 = vmatpush2.msra.mxu0 0.0
    %2351 = vmatprep.subr.mxu0 0.0
    %2352 = vmatpush2.msra.mxu0 0.0
    %2353 = vmatprep.subr.mxu0 0.0
    %2354 = vmatpush2.msra.mxu0 0.0
    %2355 = vmatprep.subr.mxu0 0.0
    %2356 = vmatpush2.msra.mxu0 0.0
    %2357 = vmatprep.subr.mxu0 0.0
    %2358 = vmatpush2.msra.mxu0 0.0
    %2359 = vmatprep.subr.mxu0 0.0
    %2360 = vmatpush2.msra.mxu0 0.0
    %2361 = vmatprep.subr.mxu0 0.0
    %2362 = vmatpush2.msra.mxu0 0.0
    %2363 = vmatprep.subr.mxu0 0.0
    %2364 = vmatpush2.msra.mxu0 0.0
    %2365 = vmatprep.mubr.f32.mxu0 0.0
    %2366 = vmatmul.mubr.f32.gmra.mxu0 %v2299
    %v2367 = vpop.f32.mrf.mxu0
    %v2368 = vadd.f32 0.0, %v2367
    %v2369 = vpop.f32.mrf.mxu0
    %2370 = vdwg.mxu0
    %2372 = vrot.lane.b32.xlu0 %v2368, 32
    %v2373 = vpop.permute.xlu0 %2372
    %v2375 = vadd.f32 %v811, %v2373
    %v2376 = vtanh.pop %v2375
    %2378 = vrot.lane.b32.xlu0 %v2376, 96
    %v2379 = vpop.permute.xlu0 %2378
    %v2380 = vsel %vm911, %v2379, 0
    %2382 = vmatprep.subr.mxu0 0.0
    %2383 = vmatpush1.msra.mxu0 0.0
    %2384 = vmatprep.subr.mxu0 0.0
    %2385 = vmatpush1.msra.mxu0 0.0
    %2386 = vmatprep.subr.mxu0 0.0
    %2387 = vmatpush1.msra.mxu0 0.0
    %2388 = vmatprep.subr.mxu0 0.0
    %2389 = vmatpush1.msra.mxu0 0.0
    %2390 = vmatprep.subr.mxu0 0.0
    %2391 = vmatpush1.msra.mxu0 0.0
    %2392 = vmatprep.subr.mxu0 0.0
    %2393 = vmatpush1.msra.mxu0 0.0
    %2394 = vmatprep.subr.mxu0 0.0
    %2395 = vmatpush1.msra.mxu0 0.0
    %2396 = vmatprep.subr.mxu0 0.0
    %2397 = vmatpush1.msra.mxu0 0.0
    %2398 = vmatprep.subr.mxu0 0.0
    %2399 = vmatpush1.msra.mxu0 0.0
    %2400 = vmatprep.subr.mxu0 0.0
    %2401 = vmatpush1.msra.mxu0 0.0
    %2402 = vmatprep.subr.mxu0 0.0
    %2403 = vmatpush1.msra.mxu0 0.0
    %2404 = vmatprep.subr.mxu0 0.0
    %2405 = vmatpush1.msra.mxu0 0.0
    %2406 = vmatprep.subr.mxu0 0.0
    %2407 = vmatpush1.msra.mxu0 %v827
    %2408 = vmatprep.subr.mxu0 0.0
    %2409 = vmatpush1.msra.mxu0 %v826
    %2410 = vmatprep.subr.mxu0 0.0
    %2411 = vmatpush1.msra.mxu0 %v825
    %2412 = vmatprep.subr.mxu0 0.0
    %2413 = vmatpush1.msra.mxu0 %v824
    %2414 = vmatprep.subr.mxu0 0.0
    %2415 = vmatpush2.msra.mxu0 0.0
    %2416 = vmatprep.subr.mxu0 0.0
    %2417 = vmatpush2.msra.mxu0 0.0
    %2418 = vmatprep.subr.mxu0 0.0
    %2419 = vmatpush2.msra.mxu0 0.0
    %2420 = vmatprep.subr.mxu0 0.0
    %2421 = vmatpush2.msra.mxu0 0.0
    %2422 = vmatprep.subr.mxu0 0.0
    %2423 = vmatpush2.msra.mxu0 0.0
    %2424 = vmatprep.subr.mxu0 0.0
    %2425 = vmatpush2.msra.mxu0 0.0
    %2426 = vmatprep.subr.mxu0 0.0
    %2427 = vmatpush2.msra.mxu0 0.0
    %2428 = vmatprep.subr.mxu0 0.0
    %2429 = vmatpush2.msra.mxu0 0.0
    %2430 = vmatprep.subr.mxu0 0.0
    %2431 = vmatpush2.msra.mxu0 0.0
    %2432 = vmatprep.subr.mxu0 0.0
    %2433 = vmatpush2.msra.mxu0 0.0
    %2434 = vmatprep.subr.mxu0 0.0
    %2435 = vmatpush2.msra.mxu0 0.0
    %2436 = vmatprep.subr.mxu0 0.0
    %2437 = vmatpush2.msra.mxu0 0.0
    %2438 = vmatprep.subr.mxu0 0.0
    %2439 = vmatpush2.msra.mxu0 0.0
    %2440 = vmatprep.subr.mxu0 0.0
    %2441 = vmatpush2.msra.mxu0 0.0
    %2442 = vmatprep.subr.mxu0 0.0
    %2443 = vmatpush2.msra.mxu0 0.0
    %2444 = vmatprep.subr.mxu0 0.0
    %2445 = vmatpush2.msra.mxu0 0.0
    %2446 = vmatprep.mubr.f32.mxu0 0.0
    %2447 = vmatmul.mubr.f32.gmra.mxu0 %v2380
    %v2448 = vpop.f32.mrf.mxu0
    %v2449 = vadd.f32 %v909, %v2448
    %v2450 = vpop.f32.mrf.mxu0
    %2451 = vdwg.mxu0
    %2452 = vrot.lane.b32.xlu0 %v2368, 96
    %v2453 = vpop.permute.xlu0 %2452
    %v2455 = vadd.f32 %v2449, %v2453
    %v2456 = vtanh.pop %v2455
    %v2457 = vld [vmem:[%s6] sm:$0xff]
    %v2458 = vld [vmem:[%s6 + $0x8] sm:$0xff]
    %v2459 = vld [vmem:[%s6 + $0x10] sm:$0xff]
    %v2460 = vld [vmem:[%s6 + $0x18] sm:$0xff]
    %v2461 = vld [vmem:[%s7] sm:$0x1]
    %v2463 = vlaneseq
    %v2464 = vshrl.u32 %v2463, 7
    %v2465 = vsub.s32 0, %v2464
    %v2466 = vrot.slane %v2461, %v2465
    %v2469 = vsel %vm911, %v2456, 0
    %2471 = vmatprep.subr.mxu0 0.0
    %2472 = vmatpush1.msra.mxu0 0.0
    %2473 = vmatprep.subr.mxu0 0.0
    %2474 = vmatpush1.msra.mxu0 0.0
    %2475 = vmatprep.subr.mxu0 0.0
    %2476 = vmatpush1.msra.mxu0 0.0
    %2477 = vmatprep.subr.mxu0 0.0
    %2478 = vmatpush1.msra.mxu0 0.0
    %2479 = vmatprep.subr.mxu0 0.0
    %2480 = vmatpush1.msra.mxu0 0.0
    %2481 = vmatprep.subr.mxu0 0.0
    %2482 = vmatpush1.msra.mxu0 0.0
    %2483 = vmatprep.subr.mxu0 0.0
    %2484 = vmatpush1.msra.mxu0 0.0
    %2485 = vmatprep.subr.mxu0 0.0
    %2486 = vmatpush1.msra.mxu0 0.0
    %2487 = vmatprep.subr.mxu0 0.0
    %2488 = vmatpush1.msra.mxu0 0.0
    %2489 = vmatprep.subr.mxu0 0.0
    %2490 = vmatpush1.msra.mxu0 0.0
    %2491 = vmatprep.subr.mxu0 0.0
    %2492 = vmatpush1.msra.mxu0 0.0
    %2493 = vmatprep.subr.mxu0 0.0
    %2494 = vmatpush1.msra.mxu0 0.0
    %2495 = vmatprep.subr.mxu0 0.0
    %2496 = vmatpush1.msra.mxu0 %v2460
    %2497 = vmatprep.subr.mxu0 0.0
    %2498 = vmatpush1.msra.mxu0 %v2459
    %2499 = vmatprep.subr.mxu0 0.0
    %2500 = vmatpush1.msra.mxu0 %v2458
    %2501 = vmatprep.subr.mxu0 0.0
    %2502 = vmatpush1.msra.mxu0 %v2457
    %2503 = vmatprep.subr.mxu0 0.0
    %2504 = vmatpush2.msra.mxu0 0.0
    %2505 = vmatprep.subr.mxu0 0.0
    %2506 = vmatpush2.msra.mxu0 0.0
    %2507 = vmatprep.subr.mxu0 0.0
    %2508 = vmatpush2.msra.mxu0 0.0
    %2509 = vmatprep.subr.mxu0 0.0
    %2510 = vmatpush2.msra.mxu0 0.0
    %2511 = vmatprep.subr.mxu0 0.0
    %2512 = vmatpush2.msra.mxu0 0.0
    %2513 = vmatprep.subr.mxu0 0.0
    %2514 = vmatpush2.msra.mxu0 0.0
    %2515 = vmatprep.subr.mxu0 0.0
    %2516 = vmatpush2.msra.mxu0 0.0
    %2517 = vmatprep.subr.mxu0 0.0
    %2518 = vmatpush2.msra.mxu0 0.0
    %2519 = vmatprep.subr.mxu0 0.0
    %2520 = vmatpush2.msra.mxu0 0.0
    %2521 = vmatprep.subr.mxu0 0.0
    %2522 = vmatpush2.msra.mxu0 0.0
    %2523 = vmatprep.subr.mxu0 0.0
    %2524 = vmatpush2.msra.mxu0 0.0
    %2525 = vmatprep.subr.mxu0 0.0
    %2526 = vmatpush2.msra.mxu0 0.0
    %2527 = vmatprep.subr.mxu0 0.0
    %2528 = vmatpush2.msra.mxu0 0.0
    %2529 = vmatprep.subr.mxu0 0.0
    %2530 = vmatpush2.msra.mxu0 0.0
    %2531 = vmatprep.subr.mxu0 0.0
    %2532 = vmatpush2.msra.mxu0 0.0
    %2533 = vmatprep.subr.mxu0 0.0
    %2534 = vmatpush2.msra.mxu0 0.0
    %2535 = vmatprep.mubr.f32.mxu0 0.0
    %2536 = vmatmul.mubr.f32.gmra.mxu0 %v2469
    %v2537 = vpop.f32.mrf.mxu0
    %v2538 = vadd.f32 %v2466, %v2537
    %v2539 = vpop.f32.mrf.mxu0
    %2540 = vdwg.mxu0
    %2541 = vst [vmem:[#allocation2] sm:$0xff] %v2538
    // Predicated region
    $region34: #{tpu_custom_call.1} parent=1 // pred_check
      _
    $region35: #{tpu_custom_call.1} parent=1 // pred_check_branch
      %2543 = sbr.rel (0) target = $region37
    $region36: #{tpu_custom_call.1} parent=1 // pred_region
      %s2545 = ssub.s32 128, 128
      %2546 = vsyncadd [#allocation3], %s2545
      %s2548 = sshll.u32 [#allocation2], 4
      %s2549 = int_to_ptr.vmem [resolvable:$true] %s2548
      %2551 = dma.vmem_to_hbm [thread:$0]  %s2549, 128, %s8, [#allocation3]
    $region37: #{tpu_custom_call.1} parent=1 // pred_fallthru
      _
    // Predicated region
    $region38: #{tpu_custom_call.1} parent=1 // pred_check
      _
    $region39: #{tpu_custom_call.1} parent=1 // pred_check_branch
      %2553 = sbr.rel (0) target = $region41
    $region40: #{tpu_custom_call.1} parent=1 // pred_region
      %2554 = dma.done [#allocation3], 128
    $region41: #{tpu_custom_call.1} parent=1 // pred_fallthru
      _
    %2555 = vsyncpa [#allocation3], 1

</llo_original>
